<compile_context>
chip_gen: v5e
topology: v5e:2x2
jax: 0.10.0
libtpu: 0.0.40
codegen_flags: <defaults>
</compile_context>

<pallas_src>
import functools

import jax
import jax.numpy as jnp
from jax.experimental import pallas as pl
from jax.experimental.pallas import tpu as pltpu

ENC = 64          # encoding size
PAD_IN = 16       # raw node/edge features zero-padded to this many lanes
OUT_PAD = 128     # lane-dense width for decoder output (column 0 is the real output)

_VMEM = pl.BlockSpec(memory_space=pltpu.MemorySpace.VMEM)


# ----------------------------------------------------------------------------
# Shared math — used by BOTH the Pallas kernel body and the matched JAX reference
# ----------------------------------------------------------------------------
def _relu(x):
    return jnp.maximum(x, 0.0)


def _mm(x, w):
    """x @ w on the MXU: bf16 operands, f32 accumulation."""
    return jnp.dot(x.astype(jnp.bfloat16), w.astype(jnp.bfloat16),
                   preferred_element_type=jnp.float32)


def _onehot(cond):
    """Exact 0/1 matrix in bf16 (MXU operand)."""
    return jnp.where(cond, 1.0, 0.0).astype(jnp.bfloat16)


def _gnn_compute(src_col, dst_col, dst_row, x, ef, w64, w128, bias, n_layers):
    """Full PaperGNN forward on in-VMEM data. Returns [N, OUT_PAD] (col 0 = output).

    `w64`/`w128`/`bias` may be Pallas Refs (kernel) or jnp arrays (reference);
    both support the identical static-slice syntax used below.
    """
    N = x.shape[0]
    E = ef.shape[0]
    K = ENC

    # Cursored readers over the packed parameter slabs.  Offsets are static Python
    # ints (16-row aligned), so each read is a cheap aligned slice materialized only
    # at its point of use — no up-front whole-weight load, no register spills.
    cur = {"w64": 0, "w128": 0, "b": 0}

    def W64(rows):
        o = cur["w64"]; cur["w64"] = o + rows
        return w64[o:o + rows, :]

    def W128(rows):
        o = cur["w128"]; cur["w128"] = o + rows
        return w128[o:o + rows, :]

    def B(width=K):
        o = cur["b"]; cur["b"] = o + 1
        return bias[o:o + 1, :width]

    # One-hot gather/scatter operators (exact 0/1), built once:
    #   gather  g_src/g_dst: [E, N]  (row e selects node src[e] / dst[e])
    #   scatter scat       : [N, E]  (row n sums edges with target n), lane-dense in E
    iota_en = jax.lax.broadcasted_iota(jnp.int32, (E, N), 1)
    g_src = _onehot(iota_en == src_col)
    g_dst = _onehot(iota_en == dst_col)
    scat = _onehot(jax.lax.broadcasted_iota(jnp.int32, (N, E), 0) == dst_row)

    # ---- GraphEncoder ----
    we1 = W64(PAD_IN); be1 = B(); we2 = W64(K); be2 = B()
    wf1 = W64(PAD_IN); bf1 = B(); wf2 = W64(K); bf2 = B()
    x0 = _relu(_mm(_relu(_mm(x, we1) + be1), we2) + be2)     # [N, 64]
    e0 = _relu(_mm(_relu(_mm(ef, wf1) + bf1), wf2) + bf2)    # [E, 64]
    xc, ec = x0, e0

    for _ in range(n_layers):
        w1e_e = W64(2 * K); w2e = W64(K)
        w1n_x = W64(2 * K); w1n_e = W64(2 * K); w2n = W64(K)
        w1e_xc = W128(K); w1e_x0 = W128(K)
        b1e = B(); b2e = B(); b1n = B(); b2n = B()

        # ---- edge update: relu(relu(extended @ W1e + b1e) @ W2e + b2e)
        # extended = [ec|e0 | x_cat[src] | x_cat[dst]]  with x_cat = [xc|x0]
        # split-K partial matmuls + gather-after-matmul: G @ (x_cat @ W) == x_cat[idx] @ W
        # src/dst projections are merged into one lane-dense [N,128] matmul.
        h_e = _mm(ec, w1e_e[:K]) + _mm(e0, w1e_e[K:])
        y_both = _mm(xc, w1e_xc) + _mm(x0, w1e_x0)            # [N, 128]: [y_src | y_dst]
        h_e = _relu(h_e
                    + _mm(g_src, y_both[:, :K])
                    + _mm(g_dst, y_both[:, K:])
                    + b1e)
        ec_new = _relu(_mm(h_e, w2e) + b2e)                   # [E, 64]

        # ---- node update: relu(relu([x_cat | aggr] @ W1n + b1n) @ W2n + b2n)
        # aggr = scatter_add(e_cat, dst); fused as  S @ (e_cat @ W1n[128:256])
        h_n = _mm(xc, w1n_x[:K]) + _mm(x0, w1n_x[K:])
        m = _mm(ec, w1n_e[:K]) + _mm(e0, w1n_e[K:])           # [E, 64]
        h_n = _relu(h_n + _mm(scat, m) + b1n)
        xc = _relu(_mm(h_n, w2n) + b2n)                       # [N, 64]
        ec = ec_new

    # ---- node decoder: Linear -> ReLU -> Linear (W2/b2 zero-padded to OUT_PAD lanes)
    wd1 = W64(K); bd1 = B()
    wd2 = W128(K); bd2 = B(OUT_PAD)
    out = _mm(_relu(_mm(xc, wd1) + bd1), wd2) + bd2           # [N, OUT_PAD]

    assert cur["w64"] == w64.shape[0], "w64 slab size mismatch"
    assert cur["w128"] == w128.shape[0], "w128 slab size mismatch"
    assert cur["b"] == bias.shape[0], "bias slab size mismatch"
    return out


# ----------------------------------------------------------------------------
# Pallas kernel + wrapper
# ----------------------------------------------------------------------------
def paper_gnn_kernel(src_ref, dstc_ref, dstr_ref, x_ref, ef_ref,
                     w64_ref, w128_ref, b_ref, out_ref, *, n_layers):
    out_ref[...] = _gnn_compute(
        src_ref[...], dstc_ref[...], dstr_ref[...], x_ref[...], ef_ref[...],
        w64_ref, w128_ref, b_ref, n_layers)


def pack_params(params):
    """Pack parameters into three slabs with static, 16-row-aligned block offsets:
       w64  bf16 [R64, 64]   all 64-output-lane weight blocks
       w128 bf16 [R128,128]  per-layer merged (src|dst) x-projection + padded decoder W2
       bias f32  [NB, 128]   one row per bias (real width in the low lanes)
    """
    K = ENC
    w64_blocks, w128_blocks, b_rows = [], [], []

    def add_w(w, pad_rows=None):
        w = jnp.asarray(w, jnp.float32)
        if pad_rows is not None and w.shape[0] != pad_rows:
            w = jnp.zeros((pad_rows, w.shape[1]), jnp.float32).at[:w.shape[0], :].set(w)
        w64_blocks.append(w.astype(jnp.bfloat16))

    def add_w128(w):
        w128_blocks.append(jnp.asarray(w, jnp.float32).astype(jnp.bfloat16))

    def add_b(b):
        b = jnp.asarray(b, jnp.float32).reshape(1, -1)
        b_rows.append(jnp.zeros((1, OUT_PAD), jnp.float32).at[:, :b.shape[1]].set(b))

    for key in ("node_enc", "edge_enc"):
        w1, b1, w2, b2 = params[key]
        add_w(w1, pad_rows=PAD_IN); add_b(b1)
        add_w(w2); add_b(b2)

    for lp in params["layers"]:
        w1e, b1e, w2e, b2e = lp["edge_upd"]
        w1n, b1n, w2n, b2n = lp["node_upd"]
        add_w(w1e[0:2 * K]); add_w(w2e)
        add_w(w1n[0:2 * K]); add_w(w1n[2 * K:4 * K]); add_w(w2n)
        # merged [src | dst] column blocks of W1e for the lane-dense x projection
        add_w128(jnp.concatenate([w1e[2 * K:3 * K], w1e[4 * K:5 * K]], axis=1))
        add_w128(jnp.concatenate([w1e[3 * K:4 * K], w1e[5 * K:6 * K]], axis=1))
        add_b(b1e); add_b(b2e); add_b(b1n); add_b(b2n)

    wd1, bd1, wd2, bd2 = params["node_dec"]
    add_w(wd1); add_b(bd1)
    add_w128(jnp.zeros((K, OUT_PAD), jnp.float32).at[:, :wd2.shape[1]].set(
        jnp.asarray(wd2, jnp.float32)))
    add_b(bd2)

    return (jnp.concatenate(w64_blocks, axis=0),
            jnp.concatenate(w128_blocks, axis=0),
            jnp.concatenate(b_rows, axis=0))


def _pad_feats(a, width):
    a = jnp.asarray(a, jnp.float32)
    return jnp.zeros((a.shape[0], width), jnp.float32).at[:, :a.shape[1]].set(a)


def paper_gnn_forward(params, x, edge_features, edge_index):
    n_layers = len(params["layers"])
    N = x.shape[0]
    E = edge_features.shape[0]
    w64, w128, bias = pack_params(params)
    src = edge_index[0].astype(jnp.int32)
    dst = edge_index[1].astype(jnp.int32)

    out = pl.pallas_call(
        functools.partial(paper_gnn_kernel, n_layers=n_layers),
        out_shape=jax.ShapeDtypeStruct((N, OUT_PAD), jnp.float32),
        in_specs=[_VMEM] * 8,
        out_specs=_VMEM,
    )(src.reshape(E, 1), dst.reshape(E, 1), dst.reshape(1, E),
      _pad_feats(x, PAD_IN), _pad_feats(edge_features, PAD_IN),
      w64, w128, bias)
    return out[:, :1]


# ----------------------------------------------------------------------------
# Parameter initialization (deterministic, PyTorch-Linear-style uniform bounds)
# ----------------------------------------------------------------------------
def init_linear(key, din, dout):
    k_w, k_b = jax.random.split(key)
    bound = 1.0 / (din ** 0.5)
    w = jax.random.uniform(k_w, (din, dout), jnp.float32, -bound, bound)
    b = jax.random.uniform(k_b, (1, dout), jnp.float32, -bound, bound)
    return w, b


def init_mlp2(key, din, hidden, dout):
    k1, k2 = jax.random.split(key)
    w1, b1 = init_linear(k1, din, hidden)
    w2, b2 = init_linear(k2, hidden, dout)
    return (w1, b1, w2, b2)


def init_paper_gnn(key, n_layers, node_dim=2, edge_dim=3, enc=ENC):
    keys = jax.random.split(key, 3 + 2 * n_layers)
    params = {
        "node_enc": init_mlp2(keys[0], node_dim, enc, enc),
        "edge_enc": init_mlp2(keys[1], edge_dim, enc, enc),
        "node_dec": init_mlp2(keys[2], enc, enc, 1),
        "layers": [],
    }
    for i in range(n_layers):
        params["layers"].append({
            "edge_upd": init_mlp2(keys[3 + 2 * i], 3 * 2 * enc, enc, enc),
            "node_upd": init_mlp2(keys[4 + 2 * i], 2 * 2 * enc, enc, enc),
        })
    return params


# ----------------------------------------------------------------------------
# References
# ----------------------------------------------------------------------------
def _ref_forward_matched(params, x, edge_features, edge_index):
    """Plain-JAX reference reproducing the kernel's exact algebra / bf16 cast points."""
    n_layers = len(params["layers"])
    E = edge_features.shape[0]
    w64, w128, bias = pack_params(params)
    src = edge_index[0].astype(jnp.int32)
    dst = edge_index[1].astype(jnp.int32)
    out = _gnn_compute(src.reshape(E, 1), dst.reshape(E, 1), dst.reshape(1, E),
                       _pad_feats(x, PAD_IN), _pad_feats(edge_features, PAD_IN),
                       w64, w128, bias, n_layers)
    return out[:, :1]


def _ref_mlp2(x, w1, b1, w2, b2, final_relu):
    h = jnp.maximum(x @ w1 + b1, 0.0)
    y = h @ w2 + b2
    return jnp.maximum(y, 0.0) if final_relu else y


def _ref_forward_f32(params, x, edge_features, edge_index):
    """Pure-f32 reference with the original PyTorch ordering (concat/gather/scatter)."""
    N = x.shape[0]
    src, dst = edge_index[0], edge_index[1]
    x0 = _ref_mlp2(x, *params["node_enc"], True)
    e0 = _ref_mlp2(edge_features, *params["edge_enc"], True)
    xc, ec = x0, e0
    for lp in params["layers"]:
        x_cat = jnp.concatenate([xc, x0], axis=1)
        e_cat = jnp.concatenate([ec, e0], axis=1)
        extended = jnp.concatenate([e_cat, x_cat[src], x_cat[dst]], axis=1)
        aggr = jax.ops.segment_sum(e_cat, dst, num_segments=N)
        xc = _ref_mlp2(jnp.concatenate([x_cat, aggr], axis=1), *lp["node_upd"], True)
        ec = _ref_mlp2(extended, *lp["edge_upd"], True)
    return _ref_mlp2(xc, *params["node_dec"], False)


# ----------------------------------------------------------------------------
if __name__ == "__main__":
    key = jax.random.PRNGKey(0)
    k_par, k_x, k_e, k_src, k_dst = jax.random.split(key, 5)

    n_layers = 2
    N, E = 16, 32                         # nodes, edges
    params = init_paper_gnn(k_par, n_layers)

    x = jax.random.normal(k_x, (N, 2), jnp.float32)            # node features
    edge_features = jax.random.normal(k_e, (E, 3), jnp.float32)
    edge_index = jnp.stack([
        jax.random.randint(k_src, (E,), 0, N, jnp.int32),
        jax.random.randint(k_dst, (E,), 0, N, jnp.int32),
    ], axis=0)                                                  # [2, E]

    fwd = jax.jit(paper_gnn_forward)
    out = jax.block_until_ready(fwd(params, x, edge_features, edge_index))
    assert out.shape == (N, 1)

    ref_matched = jax.block_until_ready(
        _ref_forward_matched(params, x, edge_features, edge_index))
    ref_f32 = jax.block_until_ready(
        _ref_forward_f32(params, x, edge_features, edge_index))

    assert jnp.allclose(out, ref_matched, atol=1e-2, rtol=1e-2), \
        "mismatch vs bf16-matched reference"
    assert jnp.allclose(out, ref_f32, atol=5e-2, rtol=5e-2), \
        "mismatch vs f32 original-semantics reference"

    print("KERNEL_OK")
</pallas_src>

<mosaic_0001>
module attributes {stable_mosaic.version = 11 : i64} {
  func.func @paper_gnn_kernel(%arg0: memref<32x1xi32, #tpu.memory_space<vmem>>, %arg1: memref<32x1xi32, #tpu.memory_space<vmem>>, %arg2: memref<1x32xi32, #tpu.memory_space<vmem>>, %arg3: memref<16x16xf32, #tpu.memory_space<vmem>>, %arg4: memref<32x16xf32, #tpu.memory_space<vmem>>, %arg5: memref<1248x64xbf16, #tpu.memory_space<vmem>>, %arg6: memref<320x128xbf16, #tpu.memory_space<vmem>>, %arg7: memref<14x128xf32, #tpu.memory_space<vmem>>, %arg8: memref<16x128xf32, #tpu.memory_space<vmem>>) attributes {dimension_semantics = [], scalar_prefetch = 0 : i64, scratch_operands = 0 : i64, tpu.core_type = #tpu.core_type<tc>} {
    %c0 = arith.constant 0 : index
    %c0_0 = arith.constant 0 : index
    %0 = vector.load %arg0[%c0, %c0_0] : memref<32x1xi32, #tpu.memory_space<vmem>>, vector<32x1xi32>
    %c0_1 = arith.constant 0 : index
    %c0_2 = arith.constant 0 : index
    %1 = vector.load %arg1[%c0_1, %c0_2] : memref<32x1xi32, #tpu.memory_space<vmem>>, vector<32x1xi32>
    %c0_3 = arith.constant 0 : index
    %c0_4 = arith.constant 0 : index
    %2 = vector.load %arg2[%c0_3, %c0_4] : memref<1x32xi32, #tpu.memory_space<vmem>>, vector<1x32xi32>
    %c0_5 = arith.constant 0 : index
    %c0_6 = arith.constant 0 : index
    %3 = vector.load %arg3[%c0_5, %c0_6] : memref<16x16xf32, #tpu.memory_space<vmem>>, vector<16x16xf32>
    %c0_7 = arith.constant 0 : index
    %c0_8 = arith.constant 0 : index
    %4 = vector.load %arg4[%c0_7, %c0_8] : memref<32x16xf32, #tpu.memory_space<vmem>>, vector<32x16xf32>
    %5 = tpu.iota {dimensions = array<i32: 1>} : vector<32x16xi32>
    %6 = vector.broadcast %0 : vector<32x1xi32> to vector<32x16xi32>
    %7 = arith.cmpi eq, %5, %6 : vector<32x16xi32>
    %cst = arith.constant 1.000000e+00 : f32
    %cst_9 = arith.constant 0.000000e+00 : f32
    %8 = vector.broadcast %cst : f32 to vector<32x16xf32>
    %9 = vector.broadcast %cst_9 : f32 to vector<32x16xf32>
    %10 = arith.select %7, %8, %9 : vector<32x16xi1>, vector<32x16xf32>
    %11 = arith.truncf %10 : vector<32x16xf32> to vector<32x16xbf16>
    %12 = vector.broadcast %1 : vector<32x1xi32> to vector<32x16xi32>
    %13 = arith.cmpi eq, %5, %12 : vector<32x16xi32>
    %cst_10 = arith.constant 1.000000e+00 : f32
    %cst_11 = arith.constant 0.000000e+00 : f32
    %14 = vector.broadcast %cst_10 : f32 to vector<32x16xf32>
    %15 = vector.broadcast %cst_11 : f32 to vector<32x16xf32>
    %16 = arith.select %13, %14, %15 : vector<32x16xi1>, vector<32x16xf32>
    %17 = arith.truncf %16 : vector<32x16xf32> to vector<32x16xbf16>
    %18 = tpu.iota {dimensions = array<i32: 0>} : vector<16x32xi32>
    %19 = vector.broadcast %2 : vector<1x32xi32> to vector<16x32xi32>
    %20 = arith.cmpi eq, %18, %19 : vector<16x32xi32>
    %cst_12 = arith.constant 1.000000e+00 : f32
    %cst_13 = arith.constant 0.000000e+00 : f32
    %21 = vector.broadcast %cst_12 : f32 to vector<16x32xf32>
    %22 = vector.broadcast %cst_13 : f32 to vector<16x32xf32>
    %23 = arith.select %20, %21, %22 : vector<16x32xi1>, vector<16x32xf32>
    %24 = arith.truncf %23 : vector<16x32xf32> to vector<16x32xbf16>
    %c0_14 = arith.constant 0 : index
    %c0_15 = arith.constant 0 : index
    %25 = vector.load %arg5[%c0_14, %c0_15] : memref<1248x64xbf16, #tpu.memory_space<vmem>>, vector<16x64xbf16>
    %c0_16 = arith.constant 0 : index
    %c0_17 = arith.constant 0 : index
    %26 = vector.load %arg7[%c0_16, %c0_17] : memref<14x128xf32, #tpu.memory_space<vmem>>, vector<1x64xf32>
    %c16 = arith.constant 16 : index
    %c0_18 = arith.constant 0 : index
    %27 = vector.load %arg5[%c16, %c0_18] : memref<1248x64xbf16, #tpu.memory_space<vmem>>, vector<64x64xbf16>
    %c1 = arith.constant 1 : index
    %c0_19 = arith.constant 0 : index
    %28 = vector.load %arg7[%c1, %c0_19] : memref<14x128xf32, #tpu.memory_space<vmem>>, vector<1x64xf32>
    %c80 = arith.constant 80 : index
    %c0_20 = arith.constant 0 : index
    %29 = vector.load %arg5[%c80, %c0_20] : memref<1248x64xbf16, #tpu.memory_space<vmem>>, vector<16x64xbf16>
    %c2 = arith.constant 2 : index
    %c0_21 = arith.constant 0 : index
    %30 = vector.load %arg7[%c2, %c0_21] : memref<14x128xf32, #tpu.memory_space<vmem>>, vector<1x64xf32>
    %c96 = arith.constant 96 : index
    %c0_22 = arith.constant 0 : index
    %31 = vector.load %arg5[%c96, %c0_22] : memref<1248x64xbf16, #tpu.memory_space<vmem>>, vector<64x64xbf16>
    %c3 = arith.constant 3 : index
    %c0_23 = arith.constant 0 : index
    %32 = vector.load %arg7[%c3, %c0_23] : memref<14x128xf32, #tpu.memory_space<vmem>>, vector<1x64xf32>
    %33 = arith.truncf %3 : vector<16x16xf32> to vector<16x16xbf16>
    %cst_24 = arith.constant dense<0.000000e+00> : vector<16x64xf32>
    %34 = tpu.matmul %33, %25, %cst_24 {dimension_numbers = #tpu.dot_dimension_numbers<[1], [0], [0], [1], [0, 0, 1, 1], [], []>} : vector<16x16xbf16>, vector<16x64xbf16>, vector<16x64xf32> -> vector<16x64xf32>
    %35 = vector.broadcast %26 : vector<1x64xf32> to vector<16x64xf32>
    %36 = arith.addf %34, %35 : vector<16x64xf32>
    %cst_25 = arith.constant 0.000000e+00 : f32
    %37 = vector.broadcast %cst_25 : f32 to vector<16x64xf32>
    %38 = arith.maximumf %36, %37 : vector<16x64xf32>
    %39 = arith.truncf %38 : vector<16x64xf32> to vector<16x64xbf16>
    %cst_26 = arith.constant dense<0.000000e+00> : vector<16x64xf32>
    %40 = tpu.matmul %39, %27, %cst_26 {dimension_numbers = #tpu.dot_dimension_numbers<[1], [0], [0], [1], [0, 0, 1, 1], [], []>} : vector<16x64xbf16>, vector<64x64xbf16>, vector<16x64xf32> -> vector<16x64xf32>
    %41 = vector.broadcast %28 : vector<1x64xf32> to vector<16x64xf32>
    %42 = arith.addf %40, %41 : vector<16x64xf32>
    %cst_27 = arith.constant 0.000000e+00 : f32
    %43 = vector.broadcast %cst_27 : f32 to vector<16x64xf32>
    %44 = arith.maximumf %42, %43 : vector<16x64xf32>
    %45 = arith.truncf %4 : vector<32x16xf32> to vector<32x16xbf16>
    %cst_28 = arith.constant dense<0.000000e+00> : vector<32x64xf32>
    %46 = tpu.matmul %45, %29, %cst_28 {dimension_numbers = #tpu.dot_dimension_numbers<[1], [0], [0], [1], [0, 0, 1, 1], [], []>} : vector<32x16xbf16>, vector<16x64xbf16>, vector<32x64xf32> -> vector<32x64xf32>
    %47 = vector.broadcast %30 : vector<1x64xf32> to vector<32x64xf32>
    %48 = arith.addf %46, %47 : vector<32x64xf32>
    %cst_29 = arith.constant 0.000000e+00 : f32
    %49 = vector.broadcast %cst_29 : f32 to vector<32x64xf32>
    %50 = arith.maximumf %48, %49 : vector<32x64xf32>
    %51 = arith.truncf %50 : vector<32x64xf32> to vector<32x64xbf16>
    %cst_30 = arith.constant dense<0.000000e+00> : vector<32x64xf32>
    %52 = tpu.matmul %51, %31, %cst_30 {dimension_numbers = #tpu.dot_dimension_numbers<[1], [0], [0], [1], [0, 0, 1, 1], [], []>} : vector<32x64xbf16>, vector<64x64xbf16>, vector<32x64xf32> -> vector<32x64xf32>
    %53 = vector.broadcast %32 : vector<1x64xf32> to vector<32x64xf32>
    %54 = arith.addf %52, %53 : vector<32x64xf32>
    %cst_31 = arith.constant 0.000000e+00 : f32
    %55 = vector.broadcast %cst_31 : f32 to vector<32x64xf32>
    %56 = arith.maximumf %54, %55 : vector<32x64xf32>
    %c160 = arith.constant 160 : index
    %c0_32 = arith.constant 0 : index
    %57 = vector.load %arg5[%c160, %c0_32] : memref<1248x64xbf16, #tpu.memory_space<vmem>>, vector<128x64xbf16>
    %c288 = arith.constant 288 : index
    %c0_33 = arith.constant 0 : index
    %58 = vector.load %arg5[%c288, %c0_33] : memref<1248x64xbf16, #tpu.memory_space<vmem>>, vector<64x64xbf16>
    %c352 = arith.constant 352 : index
    %c0_34 = arith.constant 0 : index
    %59 = vector.load %arg5[%c352, %c0_34] : memref<1248x64xbf16, #tpu.memory_space<vmem>>, vector<128x64xbf16>
    %c480 = arith.constant 480 : index
    %c0_35 = arith.constant 0 : index
    %60 = vector.load %arg5[%c480, %c0_35] : memref<1248x64xbf16, #tpu.memory_space<vmem>>, vector<128x64xbf16>
    %c608 = arith.constant 608 : index
    %c0_36 = arith.constant 0 : index
    %61 = vector.load %arg5[%c608, %c0_36] : memref<1248x64xbf16, #tpu.memory_space<vmem>>, vector<64x64xbf16>
    %c0_37 = arith.constant 0 : index
    %c0_38 = arith.constant 0 : index
    %62 = vector.load %arg6[%c0_37, %c0_38] : memref<320x128xbf16, #tpu.memory_space<vmem>>, vector<64x128xbf16>
    %c64 = arith.constant 64 : index
    %c0_39 = arith.constant 0 : index
    %63 = vector.load %arg6[%c64, %c0_39] : memref<320x128xbf16, #tpu.memory_space<vmem>>, vector<64x128xbf16>
    %c4 = arith.constant 4 : index
    %c0_40 = arith.constant 0 : index
    %64 = vector.load %arg7[%c4, %c0_40] : memref<14x128xf32, #tpu.memory_space<vmem>>, vector<1x64xf32>
    %c5 = arith.constant 5 : index
    %c0_41 = arith.constant 0 : index
    %65 = vector.load %arg7[%c5, %c0_41] : memref<14x128xf32, #tpu.memory_space<vmem>>, vector<1x64xf32>
    %c6 = arith.constant 6 : index
    %c0_42 = arith.constant 0 : index
    %66 = vector.load %arg7[%c6, %c0_42] : memref<14x128xf32, #tpu.memory_space<vmem>>, vector<1x64xf32>
    %c7 = arith.constant 7 : index
    %c0_43 = arith.constant 0 : index
    %67 = vector.load %arg7[%c7, %c0_43] : memref<14x128xf32, #tpu.memory_space<vmem>>, vector<1x64xf32>
    %68 = vector.extract_strided_slice %57 {offsets = [0, 0], sizes = [64, 64], strides = [1, 1]} : vector<128x64xbf16> to vector<64x64xbf16>
    %69 = arith.truncf %56 : vector<32x64xf32> to vector<32x64xbf16>
    %cst_44 = arith.constant dense<0.000000e+00> : vector<32x64xf32>
    %70 = tpu.matmul %69, %68, %cst_44 {dimension_numbers = #tpu.dot_dimension_numbers<[1], [0], [0], [1], [0, 0, 1, 1], [], []>} : vector<32x64xbf16>, vector<64x64xbf16>, vector<32x64xf32> -> vector<32x64xf32>
    %71 = vector.extract_strided_slice %57 {offsets = [64, 0], sizes = [64, 64], strides = [1, 1]} : vector<128x64xbf16> to vector<64x64xbf16>
    %72 = arith.truncf %56 : vector<32x64xf32> to vector<32x64xbf16>
    %cst_45 = arith.constant dense<0.000000e+00> : vector<32x64xf32>
    %73 = tpu.matmul %72, %71, %cst_45 {dimension_numbers = #tpu.dot_dimension_numbers<[1], [0], [0], [1], [0, 0, 1, 1], [], []>} : vector<32x64xbf16>, vector<64x64xbf16>, vector<32x64xf32> -> vector<32x64xf32>
    %74 = arith.addf %70, %73 : vector<32x64xf32>
    %75 = arith.truncf %44 : vector<16x64xf32> to vector<16x64xbf16>
    %cst_46 = arith.constant dense<0.000000e+00> : vector<16x128xf32>
    %76 = tpu.matmul %75, %62, %cst_46 {dimension_numbers = #tpu.dot_dimension_numbers<[1], [0], [0], [1], [0, 0, 1, 1], [], []>} : vector<16x64xbf16>, vector<64x128xbf16>, vector<16x128xf32> -> vector<16x128xf32>
    %77 = arith.truncf %44 : vector<16x64xf32> to vector<16x64xbf16>
    %cst_47 = arith.constant dense<0.000000e+00> : vector<16x128xf32>
    %78 = tpu.matmul %77, %63, %cst_47 {dimension_numbers = #tpu.dot_dimension_numbers<[1], [0], [0], [1], [0, 0, 1, 1], [], []>} : vector<16x64xbf16>, vector<64x128xbf16>, vector<16x128xf32> -> vector<16x128xf32>
    %79 = arith.addf %76, %78 : vector<16x128xf32>
    %80 = vector.extract_strided_slice %79 {offsets = [0, 0], sizes = [16, 64], strides = [1, 1]} : vector<16x128xf32> to vector<16x64xf32>
    %81 = arith.truncf %80 : vector<16x64xf32> to vector<16x64xbf16>
    %cst_48 = arith.constant dense<0.000000e+00> : vector<32x64xf32>
    %82 = tpu.matmul %11, %81, %cst_48 {dimension_numbers = #tpu.dot_dimension_numbers<[1], [0], [0], [1], [0, 0, 1, 1], [], []>} : vector<32x16xbf16>, vector<16x64xbf16>, vector<32x64xf32> -> vector<32x64xf32>
    %83 = arith.addf %74, %82 : vector<32x64xf32>
    %84 = vector.extract_strided_slice %79 {offsets = [0, 64], sizes = [16, 64], strides = [1, 1]} : vector<16x128xf32> to vector<16x64xf32>
    %85 = arith.truncf %84 : vector<16x64xf32> to vector<16x64xbf16>
    %cst_49 = arith.constant dense<0.000000e+00> : vector<32x64xf32>
    %86 = tpu.matmul %17, %85, %cst_49 {dimension_numbers = #tpu.dot_dimension_numbers<[1], [0], [0], [1], [0, 0, 1, 1], [], []>} : vector<32x16xbf16>, vector<16x64xbf16>, vector<32x64xf32> -> vector<32x64xf32>
    %87 = arith.addf %83, %86 : vector<32x64xf32>
    %88 = vector.broadcast %64 : vector<1x64xf32> to vector<32x64xf32>
    %89 = arith.addf %87, %88 : vector<32x64xf32>
    %cst_50 = arith.constant 0.000000e+00 : f32
    %90 = vector.broadcast %cst_50 : f32 to vector<32x64xf32>
    %91 = arith.maximumf %89, %90 : vector<32x64xf32>
    %92 = arith.truncf %91 : vector<32x64xf32> to vector<32x64xbf16>
    %cst_51 = arith.constant dense<0.000000e+00> : vector<32x64xf32>
    %93 = tpu.matmul %92, %58, %cst_51 {dimension_numbers = #tpu.dot_dimension_numbers<[1], [0], [0], [1], [0, 0, 1, 1], [], []>} : vector<32x64xbf16>, vector<64x64xbf16>, vector<32x64xf32> -> vector<32x64xf32>
    %94 = vector.broadcast %65 : vector<1x64xf32> to vector<32x64xf32>
    %95 = arith.addf %93, %94 : vector<32x64xf32>
    %cst_52 = arith.constant 0.000000e+00 : f32
    %96 = vector.broadcast %cst_52 : f32 to vector<32x64xf32>
    %97 = arith.maximumf %95, %96 : vector<32x64xf32>
    %98 = vector.extract_strided_slice %59 {offsets = [0, 0], sizes = [64, 64], strides = [1, 1]} : vector<128x64xbf16> to vector<64x64xbf16>
    %99 = arith.truncf %44 : vector<16x64xf32> to vector<16x64xbf16>
    %cst_53 = arith.constant dense<0.000000e+00> : vector<16x64xf32>
    %100 = tpu.matmul %99, %98, %cst_53 {dimension_numbers = #tpu.dot_dimension_numbers<[1], [0], [0], [1], [0, 0, 1, 1], [], []>} : vector<16x64xbf16>, vector<64x64xbf16>, vector<16x64xf32> -> vector<16x64xf32>
    %101 = vector.extract_strided_slice %59 {offsets = [64, 0], sizes = [64, 64], strides = [1, 1]} : vector<128x64xbf16> to vector<64x64xbf16>
    %102 = arith.truncf %44 : vector<16x64xf32> to vector<16x64xbf16>
    %cst_54 = arith.constant dense<0.000000e+00> : vector<16x64xf32>
    %103 = tpu.matmul %102, %101, %cst_54 {dimension_numbers = #tpu.dot_dimension_numbers<[1], [0], [0], [1], [0, 0, 1, 1], [], []>} : vector<16x64xbf16>, vector<64x64xbf16>, vector<16x64xf32> -> vector<16x64xf32>
    %104 = arith.addf %100, %103 : vector<16x64xf32>
    %105 = vector.extract_strided_slice %60 {offsets = [0, 0], sizes = [64, 64], strides = [1, 1]} : vector<128x64xbf16> to vector<64x64xbf16>
    %106 = arith.truncf %56 : vector<32x64xf32> to vector<32x64xbf16>
    %cst_55 = arith.constant dense<0.000000e+00> : vector<32x64xf32>
    %107 = tpu.matmul %106, %105, %cst_55 {dimension_numbers = #tpu.dot_dimension_numbers<[1], [0], [0], [1], [0, 0, 1, 1], [], []>} : vector<32x64xbf16>, vector<64x64xbf16>, vector<32x64xf32> -> vector<32x64xf32>
    %108 = vector.extract_strided_slice %60 {offsets = [64, 0], sizes = [64, 64], strides = [1, 1]} : vector<128x64xbf16> to vector<64x64xbf16>
    %109 = arith.truncf %56 : vector<32x64xf32> to vector<32x64xbf16>
    %cst_56 = arith.constant dense<0.000000e+00> : vector<32x64xf32>
    %110 = tpu.matmul %109, %108, %cst_56 {dimension_numbers = #tpu.dot_dimension_numbers<[1], [0], [0], [1], [0, 0, 1, 1], [], []>} : vector<32x64xbf16>, vector<64x64xbf16>, vector<32x64xf32> -> vector<32x64xf32>
    %111 = arith.addf %107, %110 : vector<32x64xf32>
    %112 = arith.truncf %111 : vector<32x64xf32> to vector<32x64xbf16>
    %cst_57 = arith.constant dense<0.000000e+00> : vector<16x64xf32>
    %113 = tpu.matmul %24, %112, %cst_57 {dimension_numbers = #tpu.dot_dimension_numbers<[1], [0], [0], [1], [0, 0, 1, 1], [], []>} : vector<16x32xbf16>, vector<32x64xbf16>, vector<16x64xf32> -> vector<16x64xf32>
    %114 = arith.addf %104, %113 : vector<16x64xf32>
    %115 = vector.broadcast %66 : vector<1x64xf32> to vector<16x64xf32>
    %116 = arith.addf %114, %115 : vector<16x64xf32>
    %cst_58 = arith.constant 0.000000e+00 : f32
    %117 = vector.broadcast %cst_58 : f32 to vector<16x64xf32>
    %118 = arith.maximumf %116, %117 : vector<16x64xf32>
    %119 = arith.truncf %118 : vector<16x64xf32> to vector<16x64xbf16>
    %cst_59 = arith.constant dense<0.000000e+00> : vector<16x64xf32>
    %120 = tpu.matmul %119, %61, %cst_59 {dimension_numbers = #tpu.dot_dimension_numbers<[1], [0], [0], [1], [0, 0, 1, 1], [], []>} : vector<16x64xbf16>, vector<64x64xbf16>, vector<16x64xf32> -> vector<16x64xf32>
    %121 = vector.broadcast %67 : vector<1x64xf32> to vector<16x64xf32>
    %122 = arith.addf %120, %121 : vector<16x64xf32>
    %cst_60 = arith.constant 0.000000e+00 : f32
    %123 = vector.broadcast %cst_60 : f32 to vector<16x64xf32>
    %124 = arith.maximumf %122, %123 : vector<16x64xf32>
    %c864 = arith.constant 864 : index
    %c0_61 = arith.constant 0 : index
    %125 = vector.load %arg5[%c864, %c0_61] : memref<1248x64xbf16, #tpu.memory_space<vmem>>, vector<128x64xbf16>
    %c992 = arith.constant 992 : index
    %c0_62 = arith.constant 0 : index
    %126 = vector.load %arg5[%c992, %c0_62] : memref<1248x64xbf16, #tpu.memory_space<vmem>>, vector<128x64xbf16>
    %c1120 = arith.constant 1120 : index
    %c0_63 = arith.constant 0 : index
    %127 = vector.load %arg5[%c1120, %c0_63] : memref<1248x64xbf16, #tpu.memory_space<vmem>>, vector<64x64xbf16>
    %c10 = arith.constant 10 : index
    %c0_64 = arith.constant 0 : index
    %128 = vector.load %arg7[%c10, %c0_64] : memref<14x128xf32, #tpu.memory_space<vmem>>, vector<1x64xf32>
    %c11 = arith.constant 11 : index
    %c0_65 = arith.constant 0 : index
    %129 = vector.load %arg7[%c11, %c0_65] : memref<14x128xf32, #tpu.memory_space<vmem>>, vector<1x64xf32>
    %130 = vector.extract_strided_slice %125 {offsets = [0, 0], sizes = [64, 64], strides = [1, 1]} : vector<128x64xbf16> to vector<64x64xbf16>
    %131 = arith.truncf %124 : vector<16x64xf32> to vector<16x64xbf16>
    %cst_66 = arith.constant dense<0.000000e+00> : vector<16x64xf32>
    %132 = tpu.matmul %131, %130, %cst_66 {dimension_numbers = #tpu.dot_dimension_numbers<[1], [0], [0], [1], [0, 0, 1, 1], [], []>} : vector<16x64xbf16>, vector<64x64xbf16>, vector<16x64xf32> -> vector<16x64xf32>
    %133 = vector.extract_strided_slice %125 {offsets = [64, 0], sizes = [64, 64], strides = [1, 1]} : vector<128x64xbf16> to vector<64x64xbf16>
    %134 = arith.truncf %44 : vector<16x64xf32> to vector<16x64xbf16>
    %cst_67 = arith.constant dense<0.000000e+00> : vector<16x64xf32>
    %135 = tpu.matmul %134, %133, %cst_67 {dimension_numbers = #tpu.dot_dimension_numbers<[1], [0], [0], [1], [0, 0, 1, 1], [], []>} : vector<16x64xbf16>, vector<64x64xbf16>, vector<16x64xf32> -> vector<16x64xf32>
    %136 = arith.addf %132, %135 : vector<16x64xf32>
    %137 = vector.extract_strided_slice %126 {offsets = [0, 0], sizes = [64, 64], strides = [1, 1]} : vector<128x64xbf16> to vector<64x64xbf16>
    %138 = arith.truncf %97 : vector<32x64xf32> to vector<32x64xbf16>
    %cst_68 = arith.constant dense<0.000000e+00> : vector<32x64xf32>
    %139 = tpu.matmul %138, %137, %cst_68 {dimension_numbers = #tpu.dot_dimension_numbers<[1], [0], [0], [1], [0, 0, 1, 1], [], []>} : vector<32x64xbf16>, vector<64x64xbf16>, vector<32x64xf32> -> vector<32x64xf32>
    %140 = vector.extract_strided_slice %126 {offsets = [64, 0], sizes = [64, 64], strides = [1, 1]} : vector<128x64xbf16> to vector<64x64xbf16>
    %141 = arith.truncf %56 : vector<32x64xf32> to vector<32x64xbf16>
    %cst_69 = arith.constant dense<0.000000e+00> : vector<32x64xf32>
    %142 = tpu.matmul %141, %140, %cst_69 {dimension_numbers = #tpu.dot_dimension_numbers<[1], [0], [0], [1], [0, 0, 1, 1], [], []>} : vector<32x64xbf16>, vector<64x64xbf16>, vector<32x64xf32> -> vector<32x64xf32>
    %143 = arith.addf %139, %142 : vector<32x64xf32>
    %144 = arith.truncf %143 : vector<32x64xf32> to vector<32x64xbf16>
    %cst_70 = arith.constant dense<0.000000e+00> : vector<16x64xf32>
    %145 = tpu.matmul %24, %144, %cst_70 {dimension_numbers = #tpu.dot_dimension_numbers<[1], [0], [0], [1], [0, 0, 1, 1], [], []>} : vector<16x32xbf16>, vector<32x64xbf16>, vector<16x64xf32> -> vector<16x64xf32>
    %146 = arith.addf %136, %145 : vector<16x64xf32>
    %147 = vector.broadcast %128 : vector<1x64xf32> to vector<16x64xf32>
    %148 = arith.addf %146, %147 : vector<16x64xf32>
    %cst_71 = arith.constant 0.000000e+00 : f32
    %149 = vector.broadcast %cst_71 : f32 to vector<16x64xf32>
    %150 = arith.maximumf %148, %149 : vector<16x64xf32>
    %151 = arith.truncf %150 : vector<16x64xf32> to vector<16x64xbf16>
    %cst_72 = arith.constant dense<0.000000e+00> : vector<16x64xf32>
    %152 = tpu.matmul %151, %127, %cst_72 {dimension_numbers = #tpu.dot_dimension_numbers<[1], [0], [0], [1], [0, 0, 1, 1], [], []>} : vector<16x64xbf16>, vector<64x64xbf16>, vector<16x64xf32> -> vector<16x64xf32>
    %153 = vector.broadcast %129 : vector<1x64xf32> to vector<16x64xf32>
    %154 = arith.addf %152, %153 : vector<16x64xf32>
    %cst_73 = arith.constant 0.000000e+00 : f32
    %155 = vector.broadcast %cst_73 : f32 to vector<16x64xf32>
    %156 = arith.maximumf %154, %155 : vector<16x64xf32>
    %c1184 = arith.constant 1184 : index
    %c0_74 = arith.constant 0 : index
    %157 = vector.load %arg5[%c1184, %c0_74] : memref<1248x64xbf16, #tpu.memory_space<vmem>>, vector<64x64xbf16>
    %c12 = arith.constant 12 : index
    %c0_75 = arith.constant 0 : index
    %158 = vector.load %arg7[%c12, %c0_75] : memref<14x128xf32, #tpu.memory_space<vmem>>, vector<1x64xf32>
    %c256 = arith.constant 256 : index
    %c0_76 = arith.constant 0 : index
    %159 = vector.load %arg6[%c256, %c0_76] : memref<320x128xbf16, #tpu.memory_space<vmem>>, vector<64x128xbf16>
    %c13 = arith.constant 13 : index
    %c0_77 = arith.constant 0 : index
    %160 = vector.load %arg7[%c13, %c0_77] : memref<14x128xf32, #tpu.memory_space<vmem>>, vector<1x128xf32>
    %161 = arith.truncf %156 : vector<16x64xf32> to vector<16x64xbf16>
    %cst_78 = arith.constant dense<0.000000e+00> : vector<16x64xf32>
    %162 = tpu.matmul %161, %157, %cst_78 {dimension_numbers = #tpu.dot_dimension_numbers<[1], [0], [0], [1], [0, 0, 1, 1], [], []>} : vector<16x64xbf16>, vector<64x64xbf16>, vector<16x64xf32> -> vector<16x64xf32>
    %163 = vector.broadcast %158 : vector<1x64xf32> to vector<16x64xf32>
    %164 = arith.addf %162, %163 : vector<16x64xf32>
    %cst_79 = arith.constant 0.000000e+00 : f32
    %165 = vector.broadcast %cst_79 : f32 to vector<16x64xf32>
    %166 = arith.maximumf %164, %165 : vector<16x64xf32>
    %167 = arith.truncf %166 : vector<16x64xf32> to vector<16x64xbf16>
    %cst_80 = arith.constant dense<0.000000e+00> : vector<16x128xf32>
    %168 = tpu.matmul %167, %159, %cst_80 {dimension_numbers = #tpu.dot_dimension_numbers<[1], [0], [0], [1], [0, 0, 1, 1], [], []>} : vector<16x64xbf16>, vector<64x128xbf16>, vector<16x128xf32> -> vector<16x128xf32>
    %169 = vector.broadcast %160 : vector<1x128xf32> to vector<16x128xf32>
    %170 = arith.addf %168, %169 : vector<16x128xf32>
    %c0_81 = arith.constant 0 : index
    %c0_82 = arith.constant 0 : index
    %171 = vector.load %arg8[%c0_81, %c0_82] : memref<16x128xf32, #tpu.memory_space<vmem>>, vector<16x128xf32>
    tpu.vector_store %arg8[%c0_81, %c0_82], %170 {strides = array<i32>} : memref<16x128xf32, #tpu.memory_space<vmem>>, vector<16x128xf32>,
    return
  }
}

</mosaic_0001>

<llo_original>
// kernel: paper_gnn_forward.1
$region0: #{paper_gnn_forward.1}
  #allocation0 [shape = 'u32[]', space=smem, size = 0x4, offset = 0x4, fixed_abs, tag = 'smem constant byte address 0x4 - core index']
  #allocation1 [shape = 'u32[72,128]{1,0:T(1,128)}', space=vmem, size = 0x9000, scoped, tag = 'internal scratch']
  %s0 = inlined_call_operand.vmem [shape: s32[32,1], index: 0, kind: input, shape index: {}]
  %s1 = inlined_call_operand.vmem [shape: s32[32,1], index: 1, kind: input, shape index: {}]
  %s2 = inlined_call_operand.vmem [shape: s32[1,32], index: 2, kind: input, shape index: {}]
  %s3 = inlined_call_operand.vmem [shape: f32[16,16], index: 3, kind: input, shape index: {}]
  %s4 = inlined_call_operand.vmem [shape: f32[32,16], index: 4, kind: input, shape index: {}]
  %s5 = inlined_call_operand.vmem [shape: bf16[1248,64], index: 5, kind: input, shape index: {}]
  %s6 = inlined_call_operand.vmem [shape: bf16[320,128], index: 6, kind: input, shape index: {}]
  %s7 = inlined_call_operand.vmem [shape: f32[14,128], index: 7, kind: input, shape index: {}]
  %s8 = inlined_call_operand.vmem [shape: f32[16,128], index: 8, kind: output, shape index: {}]
  %s9 = sld [smem:[#allocation0]]
  $region42: #{paper_gnn_forward.1} parent=0
    _
  %s11 = ssub.s32 1, %s9
  %s12 = scalar_select 0, %s11, %s9
  // Predicated region
  $region2: #{paper_gnn_forward.1} parent=0 // pred_check
    _
  $region3: #{paper_gnn_forward.1} parent=0 // pred_check_branch
    %14 = sbr.rel (0) target = $region5
  $region4: #{paper_gnn_forward.1} parent=0 // pred_region
    _
  $region5: #{paper_gnn_forward.1} parent=0 // pred_fallthru
    _
  // Predicated region
  $region6: #{paper_gnn_forward.1} parent=0 // pred_check
    _
  $region7: #{paper_gnn_forward.1} parent=0 // pred_check_branch
    %16 = sbr.rel (0) target = $region9
  $region8: #{paper_gnn_forward.1} parent=0 // pred_region
    _
  $region9: #{paper_gnn_forward.1} parent=0 // pred_fallthru
    _
  // Predicated region
  $region10: #{paper_gnn_forward.1} parent=0 // pred_check
    _
  $region11: #{paper_gnn_forward.1} parent=0 // pred_check_branch
    %18 = sbr.rel (0) target = $region13
  $region12: #{paper_gnn_forward.1} parent=0 // pred_region
    _
  $region13: #{paper_gnn_forward.1} parent=0 // pred_fallthru
    _
  // Predicated region
  $region14: #{paper_gnn_forward.1} parent=0 // pred_check
    _
  $region15: #{paper_gnn_forward.1} parent=0 // pred_check_branch
    %20 = sbr.rel (0) target = $region17
  $region16: #{paper_gnn_forward.1} parent=0 // pred_region
    _
  $region17: #{paper_gnn_forward.1} parent=0 // pred_fallthru
    _
  // Predicated region
  $region18: #{paper_gnn_forward.1} parent=0 // pred_check
    _
  $region19: #{paper_gnn_forward.1} parent=0 // pred_check_branch
    %22 = sbr.rel (0) target = $region21
  $region20: #{paper_gnn_forward.1} parent=0 // pred_region
    _
  $region21: #{paper_gnn_forward.1} parent=0 // pred_fallthru
    _
  // Predicated region
  $region22: #{paper_gnn_forward.1} parent=0 // pred_check
    _
  $region23: #{paper_gnn_forward.1} parent=0 // pred_check_branch
    %24 = sbr.rel (0) target = $region25
  $region24: #{paper_gnn_forward.1} parent=0 // pred_region
    _
  $region25: #{paper_gnn_forward.1} parent=0 // pred_fallthru
    _
  // Predicated region
  $region26: #{paper_gnn_forward.1} parent=0 // pred_check
    _
  $region27: #{paper_gnn_forward.1} parent=0 // pred_check_branch
    %26 = sbr.rel (0) target = $region29
  $region28: #{paper_gnn_forward.1} parent=0 // pred_region
    _
  $region29: #{paper_gnn_forward.1} parent=0 // pred_fallthru
    _
  // Predicated region
  $region30: #{paper_gnn_forward.1} parent=0 // pred_check
    _
  $region31: #{paper_gnn_forward.1} parent=0 // pred_check_branch
    %28 = sbr.rel (0) target = $region33
  $region32: #{paper_gnn_forward.1} parent=0 // pred_region
    _
  $region33: #{paper_gnn_forward.1} parent=0 // pred_fallthru
    _
  %v30 = vld [vmem:[%s0] sm:$0xff]
  %v31 = vld [vmem:[%s0 + $0x8] sm:$0xff]
  %v32 = vld [vmem:[%s0 + $0x10] sm:$0xff]
  %v33 = vld [vmem:[%s0 + $0x18] sm:$0xff]
  %v34 = vld [vmem:[%s1] sm:$0xff]
  %v35 = vld [vmem:[%s1 + $0x8] sm:$0xff]
  %v36 = vld [vmem:[%s1 + $0x10] sm:$0xff]
  %v37 = vld [vmem:[%s1 + $0x18] sm:$0xff]
  %v38 = vld [vmem:[%s2] sm:$0x1]
  %v39 = vld [vmem:[%s3] sm:$0xff]
  %v40 = vld [vmem:[%s3 + $0x8] sm:$0xff]
  %v41 = vld [vmem:[%s4] sm:$0xff]
  %v42 = vld [vmem:[%s4 + $0x8] sm:$0xff]
  %v43 = vld [vmem:[%s4 + $0x10] sm:$0xff]
  %v44 = vld [vmem:[%s4 + $0x18] sm:$0xff]
  %v45 = vlaneseq
  %v46 = vand.u32 %v45, 127
  %47 = vset.pattern.permute.xlu0 0
  %48 = vperm.xlu0 %47, %v30
  %v49 = vpop.permute.xlu0 %48
  %50 = vset.pattern.permute.xlu0 0
  %51 = vperm.xlu0 %50, %v31
  %v52 = vpop.permute.xlu0 %51
  %53 = vset.pattern.permute.xlu0 0
  %54 = vperm.xlu0 %53, %v32
  %v55 = vpop.permute.xlu0 %54
  %56 = vset.pattern.permute.xlu0 0
  %57 = vperm.xlu0 %56, %v33
  %v58 = vpop.permute.xlu0 %57
  %vm59 = vcmp.eq.s32.totalorder %v46, %v49
  %vm60 = vcmp.eq.s32.totalorder %v46, %v52
  %vm61 = vcmp.eq.s32.totalorder %v46, %v55
  %vm62 = vcmp.eq.s32.totalorder %v46, %v58
  %v63 = vsel %vm59, 1.0, 0.0
  %v64 = vsel %vm60, 1.0, 0.0
  %v65 = vsel %vm61, 1.0, 0.0
  %v66 = vsel %vm62, 1.0, 0.0
  %v67 = vpack.c.bf16 %v64, %v63
  %v68 = vpack.c.bf16 %v66, %v65
  %69 = vset.pattern.permute.xlu0 0
  %70 = vperm.xlu0 %69, %v34
  %v71 = vpop.permute.xlu0 %70
  %72 = vset.pattern.permute.xlu0 0
  %73 = vperm.xlu0 %72, %v35
  %v74 = vpop.permute.xlu0 %73
  %75 = vset.pattern.permute.xlu0 0
  %76 = vperm.xlu0 %75, %v36
  %v77 = vpop.permute.xlu0 %76
  %78 = vset.pattern.permute.xlu0 0
  %79 = vperm.xlu0 %78, %v37
  %v80 = vpop.permute.xlu0 %79
  %vm81 = vcmp.eq.s32.totalorder %v46, %v71
  %vm82 = vcmp.eq.s32.totalorder %v46, %v74
  %vm83 = vcmp.eq.s32.totalorder %v46, %v77
  %vm84 = vcmp.eq.s32.totalorder %v46, %v80
  %v85 = vsel %vm81, 1.0, 0.0
  %v86 = vsel %vm82, 1.0, 0.0
  %v87 = vsel %vm83, 1.0, 0.0
  %v88 = vsel %vm84, 1.0, 0.0
  %v89 = vpack.c.bf16 %v86, %v85
  %v90 = vpack.c.bf16 %v88, %v87
  %v91 = vlaneseq
  %v92 = vshrl.u32 %v91, 7
  %v93 = vadd.s32 %v92, 8
  %v94 = vperm.slane %v38, 0
  %vm95 = vcmp.eq.s32.totalorder %v92, %v94
  %vm96 = vcmp.eq.s32.totalorder %v93, %v94
  %v97 = vsel %vm95, 1.0, 0.0
  %v98 = vsel %vm96, 1.0, 0.0
  %v99 = vpack.c.bf16 %v98, %v97
  %v100 = vld [vmem:[%s5] sm:$0xf]
  %v101 = vld [vmem:[%s5 + $0x4] sm:$0xf]
  %v102 = vld [vmem:[%s7] sm:$0x1]
  %v103 = vld [vmem:[%s5 + $0x8] sm:$0xf]
  %v104 = vld [vmem:[%s5 + $0xc] sm:$0xf]
  %v105 = vld [vmem:[%s5 + $0x10] sm:$0xf]
  %v106 = vld [vmem:[%s5 + $0x14] sm:$0xf]
  %v107 = vld [vmem:[%s5 + $0x18] sm:$0xf]
  %v108 = vld [vmem:[%s5 + $0x1c] sm:$0xf]
  %v109 = vld [vmem:[%s5 + $0x20] sm:$0xf]
  %v110 = vld [vmem:[%s5 + $0x24] sm:$0xf]
  %v111 = vld [vmem:[%s7 + $0x1] sm:$0x1]
  %v112 = vld [vmem:[%s5 + $0x28] sm:$0xf]
  %v113 = vld [vmem:[%s5 + $0x2c] sm:$0xf]
  %v114 = vld [vmem:[%s7 + $0x2] sm:$0x1]
  %v115 = vld [vmem:[%s5 + $0x30] sm:$0xf]
  %v116 = vld [vmem:[%s5 + $0x34] sm:$0xf]
  %v117 = vld [vmem:[%s5 + $0x38] sm:$0xf]
  %v118 = vld [vmem:[%s5 + $0x3c] sm:$0xf]
  %v119 = vld [vmem:[%s5 + $0x40] sm:$0xf]
  %v120 = vld [vmem:[%s5 + $0x44] sm:$0xf]
  %v121 = vld [vmem:[%s5 + $0x48] sm:$0xf]
  %v122 = vld [vmem:[%s5 + $0x4c] sm:$0xf]
  %v123 = vld [vmem:[%s7 + $0x3] sm:$0x1]
  %v124 = vpack.c.bf16 %v40, %v39
  %v125 = vperm.slane %v102, 0
  %v128 = vunpack.c.l.b16 %v100
  %v129 = vunpack.c.l.b16 %v101
  %v130 = vpack.c.b16 %v129, %v128
  %vm132 = vcmask 130048
  %v134 = vsel %vm132, %v124, 0
  %136 = vmatpush.bf16.msra.mxu0 0
  %137 = vmatpush.bf16.msra.mxu0 0
  %138 = vmatpush.bf16.msra.mxu0 0
  %139 = vmatpush.bf16.msra.mxu0 0
  %140 = vmatpush.bf16.msra.mxu0 0
  %141 = vmatpush.bf16.msra.mxu0 0
  %142 = vmatpush.bf16.msra.mxu0 0
  %143 = vmatpush.bf16.msra.mxu0 %v130
  %144 = vmatmul.bf16.gmra.mxu0 %v134
  %v145 = vpop.f32.mrf.mxu0
  %v146 = vadd.f32 %v125, %v145
  %v147 = vpop.f32.mrf.mxu0
  %v148 = vadd.f32 %v125, %v147
  %149 = vdwg.mxu0
  %v150 = vmax.f32 %v146, 0.0
  %v151 = vmax.f32 %v148, 0.0
  %v152 = vpack.c.bf16 %v151, %v150
  %v153 = vperm.slane %v111, 0
  %v162 = vunpack.c.l.b16 %v103
  %v163 = vunpack.c.l.b16 %v104
  %v164 = vunpack.c.l.b16 %v105
  %v165 = vunpack.c.l.b16 %v106
  %v166 = vunpack.c.l.b16 %v107
  %v167 = vunpack.c.l.b16 %v108
  %v168 = vunpack.c.l.b16 %v109
  %v169 = vunpack.c.l.b16 %v110
  %v170 = vpack.c.b16 %v163, %v162
  %v171 = vpack.c.b16 %v165, %v164
  %v172 = vpack.c.b16 %v167, %v166
  %v173 = vpack.c.b16 %v169, %v168
  %vm178 = vcmask 523264
  %v180 = vsel %vm178, %v152, 0
  %182 = vmatpush.bf16.msra.mxu0 0
  %183 = vmatpush.bf16.msra.mxu0 0
  %184 = vmatpush.bf16.msra.mxu0 0
  %185 = vmatpush.bf16.msra.mxu0 0
  %186 = vmatpush.bf16.msra.mxu0 %v173
  %187 = vmatpush.bf16.msra.mxu0 %v172
  %188 = vmatpush.bf16.msra.mxu0 %v171
  %189 = vmatpush.bf16.msra.mxu0 %v170
  %190 = vmatmul.bf16.gmra.mxu0 %v180
  %v191 = vpop.f32.mrf.mxu0
  %v192 = vadd.f32 %v153, %v191
  %v193 = vpop.f32.mrf.mxu0
  %v194 = vadd.f32 %v153, %v193
  %195 = vdwg.mxu0
  %v196 = vmax.f32 %v192, 0.0
  %v197 = vmax.f32 %v194, 0.0
  %v198 = vpack.c.bf16 %v42, %v41
  %v199 = vpack.c.bf16 %v44, %v43
  %v200 = vperm.slane %v114, 0
  %v203 = vunpack.c.l.b16 %v112
  %v204 = vunpack.c.l.b16 %v113
  %v205 = vpack.c.b16 %v204, %v203
  %v208 = vsel %vm132, %v198, 0
  %v211 = vsel %vm132, %v199, 0
  %213 = vmatpush.bf16.msra.mxu0 0
  %214 = vmatpush.bf16.msra.mxu0 0
  %215 = vmatpush.bf16.msra.mxu0 0
  %216 = vmatpush.bf16.msra.mxu0 0
  %217 = vmatpush.bf16.msra.mxu0 0
  %218 = vmatpush.bf16.msra.mxu0 0
  %219 = vmatpush.bf16.msra.mxu0 0
  %220 = vmatpush.bf16.msra.mxu0 %v205
  %221 = vmatmul.bf16.gmra.mxu0 %v208
  %v222 = vpop.f32.mrf.mxu0
  %v223 = vadd.f32 %v200, %v222
  %v224 = vpop.f32.mrf.mxu0
  %v225 = vadd.f32 %v200, %v224
  %226 = vmatmul.bf16.gmra.mxu0 %v211
  %v227 = vpop.f32.mrf.mxu0
  %v228 = vadd.f32 %v200, %v227
  %v229 = vpop.f32.mrf.mxu0
  %v230 = vadd.f32 %v200, %v229
  %231 = vdwg.mxu0
  %v232 = vmax.f32 %v223, 0.0
  %v233 = vmax.f32 %v225, 0.0
  %v234 = vmax.f32 %v228, 0.0
  %v235 = vmax.f32 %v230, 0.0
  %v236 = vpack.c.bf16 %v233, %v232
  %v237 = vpack.c.bf16 %v235, %v234
  %v238 = vperm.slane %v123, 0
  %v247 = vunpack.c.l.b16 %v115
  %v248 = vunpack.c.l.b16 %v116
  %v249 = vunpack.c.l.b16 %v117
  %v250 = vunpack.c.l.b16 %v118
  %v251 = vunpack.c.l.b16 %v119
  %v252 = vunpack.c.l.b16 %v120
  %v253 = vunpack.c.l.b16 %v121
  %v254 = vunpack.c.l.b16 %v122
  %v255 = vpack.c.b16 %v248, %v247
  %v256 = vpack.c.b16 %v250, %v249
  %v257 = vpack.c.b16 %v252, %v251
  %v258 = vpack.c.b16 %v254, %v253
  %v264 = vsel %vm178, %v236, 0
  %v267 = vsel %vm178, %v237, 0
  %269 = vmatpush.bf16.msra.mxu0 0
  %270 = vmatpush.bf16.msra.mxu0 0
  %271 = vmatpush.bf16.msra.mxu0 0
  %272 = vmatpush.bf16.msra.mxu0 0
  %273 = vmatpush.bf16.msra.mxu0 %v258
  %274 = vmatpush.bf16.msra.mxu0 %v257
  %275 = vmatpush.bf16.msra.mxu0 %v256
  %276 = vmatpush.bf16.msra.mxu0 %v255
  %277 = vmatmul.bf16.gmra.mxu0 %v264
  %v278 = vpop.f32.mrf.mxu0
  %v279 = vadd.f32 %v238, %v278
  %v280 = vpop.f32.mrf.mxu0
  %v281 = vadd.f32 %v238, %v280
  %282 = vmatmul.bf16.gmra.mxu0 %v267
  %v283 = vpop.f32.mrf.mxu0
  %v284 = vadd.f32 %v238, %v283
  %v285 = vpop.f32.mrf.mxu0
  %v286 = vadd.f32 %v238, %v285
  %287 = vdwg.mxu0
  %v288 = vmax.f32 %v279, 0.0
  %v289 = vmax.f32 %v281, 0.0
  %v290 = vmax.f32 %v284, 0.0
  %v291 = vmax.f32 %v286, 0.0
  %v292 = vld [vmem:[%s5 + $0x50] sm:$0xf]
  %v293 = vld [vmem:[%s5 + $0x54] sm:$0xf]
  %v294 = vld [vmem:[%s5 + $0x58] sm:$0xf]
  %v295 = vld [vmem:[%s5 + $0x5c] sm:$0xf]
  %v296 = vld [vmem:[%s5 + $0x60] sm:$0xf]
  %v297 = vld [vmem:[%s5 + $0x64] sm:$0xf]
  %v298 = vld [vmem:[%s5 + $0x68] sm:$0xf]
  %v299 = vld [vmem:[%s5 + $0x6c] sm:$0xf]
  %v300 = vld [vmem:[%s5 + $0x70] sm:$0xf]
  %v301 = vld [vmem:[%s5 + $0x74] sm:$0xf]
  %v302 = vld [vmem:[%s5 + $0x78] sm:$0xf]
  %v303 = vld [vmem:[%s5 + $0x7c] sm:$0xf]
  %v304 = vld [vmem:[%s5 + $0x80] sm:$0xf]
  %v305 = vld [vmem:[%s5 + $0x84] sm:$0xf]
  %v306 = vld [vmem:[%s5 + $0x88] sm:$0xf]
  %v307 = vld [vmem:[%s5 + $0x8c] sm:$0xf]
  %v308 = vld [vmem:[%s5 + $0x90] sm:$0xf]
  %v309 = vld [vmem:[%s5 + $0x94] sm:$0xf]
  %v310 = vld [vmem:[%s5 + $0x98] sm:$0xf]
  %v311 = vld [vmem:[%s5 + $0x9c] sm:$0xf]
  %v312 = vld [vmem:[%s5 + $0xa0] sm:$0xf]
  %v313 = vld [vmem:[%s5 + $0xa4] sm:$0xf]
  %v314 = vld [vmem:[%s5 + $0xa8] sm:$0xf]
  %v315 = vld [vmem:[%s5 + $0xac] sm:$0xf]
  %v316 = vld [vmem:[%s5 + $0xb0] sm:$0xf]
  %v317 = vld [vmem:[%s5 + $0xb4] sm:$0xf]
  %v318 = vld [vmem:[%s5 + $0xb8] sm:$0xf]
  %v319 = vld [vmem:[%s5 + $0xbc] sm:$0xf]
  %v320 = vld [vmem:[%s5 + $0xc0] sm:$0xf]
  %v321 = vld [vmem:[%s5 + $0xc4] sm:$0xf]
  %v322 = vld [vmem:[%s5 + $0xc8] sm:$0xf]
  %v323 = vld [vmem:[%s5 + $0xcc] sm:$0xf]
  %v324 = vld [vmem:[%s5 + $0xd0] sm:$0xf]
  %v325 = vld [vmem:[%s5 + $0xd4] sm:$0xf]
  %v326 = vld [vmem:[%s5 + $0xd8] sm:$0xf]
  %v327 = vld [vmem:[%s5 + $0xdc] sm:$0xf]
  %v328 = vld [vmem:[%s5 + $0xe0] sm:$0xf]
  %v329 = vld [vmem:[%s5 + $0xe4] sm:$0xf]
  %v330 = vld [vmem:[%s5 + $0xe8] sm:$0xf]
  %v331 = vld [vmem:[%s5 + $0xec] sm:$0xf]
  %v332 = vld [vmem:[%s5 + $0xf0] sm:$0xf]
  %v333 = vld [vmem:[%s5 + $0xf4] sm:$0xf]
  %v334 = vld [vmem:[%s5 + $0xf8] sm:$0xf]
  %v335 = vld [vmem:[%s5 + $0xfc] sm:$0xf]
  %v336 = vld [vmem:[%s5 + $0x100] sm:$0xf]
  %v337 = vld [vmem:[%s5 + $0x104] sm:$0xf]
  %v338 = vld [vmem:[%s5 + $0x108] sm:$0xf]
  %v339 = vld [vmem:[%s5 + $0x10c] sm:$0xf]
  %v340 = vld [vmem:[%s5 + $0x110] sm:$0xf]
  %v341 = vld [vmem:[%s5 + $0x114] sm:$0xf]
  %v342 = vld [vmem:[%s5 + $0x118] sm:$0xf]
  %v343 = vld [vmem:[%s5 + $0x11c] sm:$0xf]
  %v344 = vld [vmem:[%s5 + $0x120] sm:$0xf]
  %v345 = vld [vmem:[%s5 + $0x124] sm:$0xf]
  %v346 = vld [vmem:[%s5 + $0x128] sm:$0xf]
  %v347 = vld [vmem:[%s5 + $0x12c] sm:$0xf]
  %v348 = vld [vmem:[%s5 + $0x130] sm:$0xf]
  %v349 = vld [vmem:[%s5 + $0x134] sm:$0xf]
  %v350 = vld [vmem:[%s5 + $0x138] sm:$0xf]
  %v351 = vld [vmem:[%s5 + $0x13c] sm:$0xf]
  %v352 = vld [vmem:[%s5 + $0x140] sm:$0xf]
  %v353 = vld [vmem:[%s5 + $0x144] sm:$0xf]
  %v354 = vld [vmem:[%s5 + $0x148] sm:$0xf]
  %v355 = vld [vmem:[%s5 + $0x14c] sm:$0xf]
  %v356 = vld [vmem:[%s6] sm:$0xf]
  %v357 = vld [vmem:[%s6 + $0x4] sm:$0xf]
  %v358 = vld [vmem:[%s6 + $0x8] sm:$0xf]
  %v359 = vld [vmem:[%s6 + $0xc] sm:$0xf]
  %v360 = vld [vmem:[%s6 + $0x10] sm:$0xf]
  %v361 = vld [vmem:[%s6 + $0x14] sm:$0xf]
  %v362 = vld [vmem:[%s6 + $0x18] sm:$0xf]
  %v363 = vld [vmem:[%s6 + $0x1c] sm:$0xf]
  %v364 = vld [vmem:[%s6 + $0x20] sm:$0xf]
  %v365 = vld [vmem:[%s6 + $0x24] sm:$0xf]
  %v366 = vld [vmem:[%s6 + $0x28] sm:$0xf]
  %v367 = vld [vmem:[%s6 + $0x2c] sm:$0xf]
  %v368 = vld [vmem:[%s6 + $0x30] sm:$0xf]
  %v369 = vld [vmem:[%s6 + $0x34] sm:$0xf]
  %v370 = vld [vmem:[%s6 + $0x38] sm:$0xf]
  %v371 = vld [vmem:[%s6 + $0x3c] sm:$0xf]
  %v372 = vld [vmem:[%s7 + $0x4] sm:$0x1]
  %v373 = vld [vmem:[%s7 + $0x5] sm:$0x1]
  %v374 = vld [vmem:[%s7 + $0x6] sm:$0x1]
  %v375 = vld [vmem:[%s7 + $0x7] sm:$0x1]
  %v376 = vpack.c.bf16 %v289, %v288
  %v377 = vpack.c.bf16 %v291, %v290
  %v386 = vunpack.c.l.b16 %v300
  %v387 = vunpack.c.l.b16 %v301
  %v388 = vunpack.c.l.b16 %v302
  %v389 = vunpack.c.l.b16 %v303
  %v390 = vunpack.c.l.b16 %v304
  %v391 = vunpack.c.l.b16 %v305
  %v392 = vunpack.c.l.b16 %v306
  %v393 = vunpack.c.l.b16 %v307
  %v394 = vpack.c.b16 %v387, %v386
  %v395 = vpack.c.b16 %v389, %v388
  %v396 = vpack.c.b16 %v391, %v390
  %v397 = vpack.c.b16 %v393, %v392
  %v403 = vsel %vm178, %v376, 0
  %v406 = vsel %vm178, %v377, 0
  %408 = vmatpush.bf16.msra.mxu0 0
  %409 = vmatpush.bf16.msra.mxu0 0
  %410 = vmatpush.bf16.msra.mxu0 0
  %411 = vmatpush.bf16.msra.mxu0 0
  %412 = vmatpush.bf16.msra.mxu0 %v397
  %413 = vmatpush.bf16.msra.mxu0 %v396
  %414 = vmatpush.bf16.msra.mxu0 %v395
  %415 = vmatpush.bf16.msra.mxu0 %v394
  %416 = vmatmul.bf16.gmra.mxu0 %v403
  %v417 = vpop.f32.mrf.mxu0
  %v418 = vadd.f32 0.0, %v417
  %v419 = vpop.f32.mrf.mxu0
  %v420 = vadd.f32 0.0, %v419
  %421 = vmatmul.bf16.gmra.mxu0 %v406
  %v422 = vpop.f32.mrf.mxu0
  %v423 = vadd.f32 0.0, %v422
  %v424 = vpop.f32.mrf.mxu0
  %v425 = vadd.f32 0.0, %v424
  %426 = vdwg.mxu0
  %v435 = vunpack.c.l.b16 %v292
  %v436 = vunpack.c.l.b16 %v293
  %v437 = vunpack.c.l.b16 %v294
  %v438 = vunpack.c.l.b16 %v295
  %v439 = vunpack.c.l.b16 %v296
  %v440 = vunpack.c.l.b16 %v297
  %v441 = vunpack.c.l.b16 %v298
  %v442 = vunpack.c.l.b16 %v299
  %v443 = vpack.c.b16 %v436, %v435
  %v444 = vpack.c.b16 %v438, %v437
  %v445 = vpack.c.b16 %v440, %v439
  %v446 = vpack.c.b16 %v442, %v441
  %451 = vmatpush.bf16.msra.mxu0 0
  %452 = vmatpush.bf16.msra.mxu0 0
  %453 = vmatpush.bf16.msra.mxu0 0
  %454 = vmatpush.bf16.msra.mxu0 0
  %455 = vmatpush.bf16.msra.mxu0 %v446
  %456 = vmatpush.bf16.msra.mxu0 %v445
  %457 = vmatpush.bf16.msra.mxu0 %v444
  %458 = vmatpush.bf16.msra.mxu0 %v443
  %459 = vmatmul.bf16.gmra.mxu0 %v403
  %v460 = vpop.f32.mrf.mxu0
  %v461 = vadd.f32 %v418, %v460
  %v462 = vpop.f32.mrf.mxu0
  %v463 = vadd.f32 %v420, %v462
  %464 = vmatmul.bf16.gmra.mxu0 %v406
  %v465 = vpop.f32.mrf.mxu0
  %v466 = vadd.f32 %v423, %v465
  %v467 = vpop.f32.mrf.mxu0
  %v468 = vadd.f32 %v425, %v467
  %469 = vdwg.mxu0
  %v470 = vpack.c.bf16 %v197, %v196
  %v479 = vunpack.c.l.b16 %v364
  %v480 = vunpack.c.l.b16 %v365
  %v481 = vunpack.c.l.b16 %v366
  %v482 = vunpack.c.l.b16 %v367
  %v483 = vunpack.c.l.b16 %v368
  %v484 = vunpack.c.l.b16 %v369
  %v485 = vunpack.c.l.b16 %v370
  %v486 = vunpack.c.l.b16 %v371
  %v487 = vpack.c.b16 %v480, %v479
  %v488 = vpack.c.b16 %v482, %v481
  %v489 = vpack.c.b16 %v484, %v483
  %v490 = vpack.c.b16 %v486, %v485
  %v496 = vsel %vm178, %v470, 0
  %498 = vmatpush.bf16.msra.mxu0 0
  %499 = vmatpush.bf16.msra.mxu0 0
  %500 = vmatpush.bf16.msra.mxu0 0
  %501 = vmatpush.bf16.msra.mxu0 0
  %502 = vmatpush.bf16.msra.mxu0 %v490
  %503 = vmatpush.bf16.msra.mxu0 %v489
  %504 = vmatpush.bf16.msra.mxu0 %v488
  %505 = vmatpush.bf16.msra.mxu0 %v487
  %506 = vmatmul.bf16.gmra.mxu0 %v496
  %v507 = vpop.f32.mrf.mxu0
  %v508 = vadd.f32 0.0, %v507
  %v509 = vpop.f32.mrf.mxu0
  %v510 = vadd.f32 0.0, %v509
  %511 = vdwg.mxu0
  %v520 = vunpack.c.l.b16 %v356
  %v521 = vunpack.c.l.b16 %v357
  %v522 = vunpack.c.l.b16 %v358
  %v523 = vunpack.c.l.b16 %v359
  %v524 = vunpack.c.l.b16 %v360
  %v525 = vunpack.c.l.b16 %v361
  %v526 = vunpack.c.l.b16 %v362
  %v527 = vunpack.c.l.b16 %v363
  %v528 = vpack.c.b16 %v521, %v520
  %v529 = vpack.c.b16 %v523, %v522
  %v530 = vpack.c.b16 %v525, %v524
  %v531 = vpack.c.b16 %v527, %v526
  %536 = vmatpush.bf16.msra.mxu0 0
  %537 = vmatpush.bf16.msra.mxu0 0
  %538 = vmatpush.bf16.msra.mxu0 0
  %539 = vmatpush.bf16.msra.mxu0 0
  %540 = vmatpush.bf16.msra.mxu0 %v531
  %541 = vmatpush.bf16.msra.mxu0 %v530
  %542 = vmatpush.bf16.msra.mxu0 %v529
  %543 = vmatpush.bf16.msra.mxu0 %v528
  %544 = vmatmul.bf16.gmra.mxu0 %v496
  %v545 = vpop.f32.mrf.mxu0
  %v546 = vadd.f32 %v508, %v545
  %v547 = vpop.f32.mrf.mxu0
  %v548 = vadd.f32 %v510, %v547
  %549 = vdwg.mxu0
  %v550 = vpack.c.bf16 %v548, %v546
  %v552 = vsel %vm132, %v67, 0
  %v555 = vsel %vm132, %v68, 0
  %557 = vmatpush.bf16.msra.mxu0 0
  %558 = vmatpush.bf16.msra.mxu0 0
  %559 = vmatpush.bf16.msra.mxu0 0
  %560 = vmatpush.bf16.msra.mxu0 0
  %561 = vmatpush.bf16.msra.mxu0 0
  %562 = vmatpush.bf16.msra.mxu0 0
  %563 = vmatpush.bf16.msra.mxu0 0
  %564 = vmatpush.bf16.msra.mxu0 %v550
  %565 = vmatmul.bf16.gmra.mxu0 %v552
  %v566 = vpop.f32.mrf.mxu0
  %v567 = vadd.f32 0.0, %v566
  %v568 = vpop.f32.mrf.mxu0
  %v569 = vadd.f32 0.0, %v568
  %570 = vmatmul.bf16.gmra.mxu0 %v555
  %v571 = vpop.f32.mrf.mxu0
  %v572 = vadd.f32 0.0, %v571
  %v573 = vpop.f32.mrf.mxu0
  %v574 = vadd.f32 0.0, %v573
  %575 = vdwg.mxu0
  %v576 = vadd.f32 %v461, %v567
  %v577 = vadd.f32 %v463, %v569
  %v578 = vadd.f32 %v466, %v572
  %v579 = vadd.f32 %v468, %v574
  %581 = vrot.lane.b32.xlu0 %v550, 64
  %v582 = vpop.permute.xlu0 %581
  %v585 = vsel %vm132, %v89, 0
  %v588 = vsel %vm132, %v90, 0
  %590 = vmatpush.bf16.msra.mxu0 0
  %591 = vmatpush.bf16.msra.mxu0 0
  %592 = vmatpush.bf16.msra.mxu0 0
  %593 = vmatpush.bf16.msra.mxu0 0
  %594 = vmatpush.bf16.msra.mxu0 0
  %595 = vmatpush.bf16.msra.mxu0 0
  %596 = vmatpush.bf16.msra.mxu0 0
  %597 = vmatpush.bf16.msra.mxu0 %v582
  %598 = vmatmul.bf16.gmra.mxu0 %v585
  %v599 = vpop.f32.mrf.mxu0
  %v600 = vadd.f32 0.0, %v599
  %v601 = vpop.f32.mrf.mxu0
  %v602 = vadd.f32 0.0, %v601
  %603 = vmatmul.bf16.gmra.mxu0 %v588
  %v604 = vpop.f32.mrf.mxu0
  %v605 = vadd.f32 0.0, %v604
  %v606 = vpop.f32.mrf.mxu0
  %v607 = vadd.f32 0.0, %v606
  %608 = vdwg.mxu0
  %v609 = vadd.f32 %v576, %v600
  %v610 = vadd.f32 %v577, %v602
  %v611 = vadd.f32 %v578, %v605
  %v612 = vadd.f32 %v579, %v607
  %v613 = vperm.slane %v372, 0
  %v614 = vadd.f32 %v609, %v613
  %v615 = vadd.f32 %v610, %v613
  %v616 = vadd.f32 %v611, %v613
  %v617 = vadd.f32 %v612, %v613
  %v618 = vmax.f32 %v614, 0.0
  %v619 = vmax.f32 %v615, 0.0
  %v620 = vmax.f32 %v616, 0.0
  %v621 = vmax.f32 %v617, 0.0
  %v622 = vpack.c.bf16 %v619, %v618
  %v623 = vpack.c.bf16 %v621, %v620
  %v624 = vperm.slane %v373, 0
  %v633 = vunpack.c.l.b16 %v308
  %v634 = vunpack.c.l.b16 %v309
  %v635 = vunpack.c.l.b16 %v310
  %v636 = vunpack.c.l.b16 %v311
  %v637 = vunpack.c.l.b16 %v312
  %v638 = vunpack.c.l.b16 %v313
  %v639 = vunpack.c.l.b16 %v314
  %v640 = vunpack.c.l.b16 %v315
  %v641 = vpack.c.b16 %v634, %v633
  %v642 = vpack.c.b16 %v636, %v635
  %v643 = vpack.c.b16 %v638, %v637
  %v644 = vpack.c.b16 %v640, %v639
  %v650 = vsel %vm178, %v622, 0
  %v653 = vsel %vm178, %v623, 0
  %655 = vmatpush.bf16.msra.mxu0 0
  %656 = vmatpush.bf16.msra.mxu0 0
  %657 = vmatpush.bf16.msra.mxu0 0
  %658 = vmatpush.bf16.msra.mxu0 0
  %659 = vmatpush.bf16.msra.mxu0 %v644
  %660 = vmatpush.bf16.msra.mxu0 %v643
  %661 = vmatpush.bf16.msra.mxu0 %v642
  %662 = vmatpush.bf16.msra.mxu0 %v641
  %663 = vmatmul.bf16.gmra.mxu0 %v650
  %v664 = vpop.f32.mrf.mxu0
  %v665 = vadd.f32 %v624, %v664
  %v666 = vpop.f32.mrf.mxu0
  %v667 = vadd.f32 %v624, %v666
  %668 = vmatmul.bf16.gmra.mxu0 %v653
  %v669 = vpop.f32.mrf.mxu0
  %v670 = vadd.f32 %v624, %v669
  %v671 = vpop.f32.mrf.mxu0
  %v672 = vadd.f32 %v624, %v671
  %673 = vdwg.mxu0
  %v674 = vmax.f32 %v665, 0.0
  %v675 = vmax.f32 %v667, 0.0
  %v676 = vmax.f32 %v670, 0.0
  %v677 = vmax.f32 %v672, 0.0
  %v686 = vunpack.c.l.b16 %v324
  %v687 = vunpack.c.l.b16 %v325
  %v688 = vunpack.c.l.b16 %v326
  %v689 = vunpack.c.l.b16 %v327
  %v690 = vunpack.c.l.b16 %v328
  %v691 = vunpack.c.l.b16 %v329
  %v692 = vunpack.c.l.b16 %v330
  %v693 = vunpack.c.l.b16 %v331
  %v694 = vpack.c.b16 %v687, %v686
  %v695 = vpack.c.b16 %v689, %v688
  %v696 = vpack.c.b16 %v691, %v690
  %v697 = vpack.c.b16 %v693, %v692
  %702 = vmatpush.bf16.msra.mxu0 0
  %703 = vmatpush.bf16.msra.mxu0 0
  %704 = vmatpush.bf16.msra.mxu0 0
  %705 = vmatpush.bf16.msra.mxu0 0
  %706 = vmatpush.bf16.msra.mxu0 %v697
  %707 = vmatpush.bf16.msra.mxu0 %v696
  %708 = vmatpush.bf16.msra.mxu0 %v695
  %709 = vmatpush.bf16.msra.mxu0 %v694
  %710 = vmatmul.bf16.gmra.mxu0 %v496
  %v711 = vpop.f32.mrf.mxu0
  %v712 = vadd.f32 0.0, %v711
  %v713 = vpop.f32.mrf.mxu0
  %v714 = vadd.f32 0.0, %v713
  %715 = vdwg.mxu0
  %v724 = vunpack.c.l.b16 %v316
  %v725 = vunpack.c.l.b16 %v317
  %v726 = vunpack.c.l.b16 %v318
  %v727 = vunpack.c.l.b16 %v319
  %v728 = vunpack.c.l.b16 %v320
  %v729 = vunpack.c.l.b16 %v321
  %v730 = vunpack.c.l.b16 %v322
  %v731 = vunpack.c.l.b16 %v323
  %v732 = vpack.c.b16 %v725, %v724
  %v733 = vpack.c.b16 %v727, %v726
  %v734 = vpack.c.b16 %v729, %v728
  %v735 = vpack.c.b16 %v731, %v730
  %740 = vmatpush.bf16.msra.mxu0 0
  %741 = vmatpush.bf16.msra.mxu0 0
  %742 = vmatpush.bf16.msra.mxu0 0
  %743 = vmatpush.bf16.msra.mxu0 0
  %744 = vmatpush.bf16.msra.mxu0 %v735
  %745 = vmatpush.bf16.msra.mxu0 %v734
  %746 = vmatpush.bf16.msra.mxu0 %v733
  %747 = vmatpush.bf16.msra.mxu0 %v732
  %748 = vmatmul.bf16.gmra.mxu0 %v496
  %v749 = vpop.f32.mrf.mxu0
  %v750 = vadd.f32 %v712, %v749
  %v751 = vpop.f32.mrf.mxu0
  %v752 = vadd.f32 %v714, %v751
  %753 = vdwg.mxu0
  %v762 = vunpack.c.l.b16 %v340
  %v763 = vunpack.c.l.b16 %v341
  %v764 = vunpack.c.l.b16 %v342
  %v765 = vunpack.c.l.b16 %v343
  %v766 = vunpack.c.l.b16 %v344
  %v767 = vunpack.c.l.b16 %v345
  %v768 = vunpack.c.l.b16 %v346
  %v769 = vunpack.c.l.b16 %v347
  %v770 = vpack.c.b16 %v763, %v762
  %v771 = vpack.c.b16 %v765, %v764
  %v772 = vpack.c.b16 %v767, %v766
  %v773 = vpack.c.b16 %v769, %v768
  %778 = vmatpush.bf16.msra.mxu0 0
  %779 = vmatpush.bf16.msra.mxu0 0
  %780 = vmatpush.bf16.msra.mxu0 0
  %781 = vmatpush.bf16.msra.mxu0 0
  %782 = vmatpush.bf16.msra.mxu0 %v773
  %783 = vmatpush.bf16.msra.mxu0 %v772
  %784 = vmatpush.bf16.msra.mxu0 %v771
  %785 = vmatpush.bf16.msra.mxu0 %v770
  %786 = vmatmul.bf16.gmra.mxu0 %v403
  %v787 = vpop.f32.mrf.mxu0
  %v788 = vadd.f32 0.0, %v787
  %v789 = vpop.f32.mrf.mxu0
  %v790 = vadd.f32 0.0, %v789
  %791 = vmatmul.bf16.gmra.mxu0 %v406
  %v792 = vpop.f32.mrf.mxu0
  %v793 = vadd.f32 0.0, %v792
  %v794 = vpop.f32.mrf.mxu0
  %v795 = vadd.f32 0.0, %v794
  %796 = vdwg.mxu0
  %v805 = vunpack.c.l.b16 %v332
  %v806 = vunpack.c.l.b16 %v333
  %v807 = vunpack.c.l.b16 %v334
  %v808 = vunpack.c.l.b16 %v335
  %v809 = vunpack.c.l.b16 %v336
  %v810 = vunpack.c.l.b16 %v337
  %v811 = vunpack.c.l.b16 %v338
  %v812 = vunpack.c.l.b16 %v339
  %v813 = vpack.c.b16 %v806, %v805
  %v814 = vpack.c.b16 %v808, %v807
  %v815 = vpack.c.b16 %v810, %v809
  %v816 = vpack.c.b16 %v812, %v811
  %821 = vmatpush.bf16.msra.mxu0 0
  %822 = vmatpush.bf16.msra.mxu0 0
  %823 = vmatpush.bf16.msra.mxu0 0
  %824 = vmatpush.bf16.msra.mxu0 0
  %825 = vmatpush.bf16.msra.mxu0 %v816
  %826 = vmatpush.bf16.msra.mxu0 %v815
  %827 = vmatpush.bf16.msra.mxu0 %v814
  %828 = vmatpush.bf16.msra.mxu0 %v813
  %829 = vmatmul.bf16.gmra.mxu0 %v403
  %v830 = vpop.f32.mrf.mxu0
  %v831 = vadd.f32 %v788, %v830
  %v832 = vpop.f32.mrf.mxu0
  %v833 = vadd.f32 %v790, %v832
  %834 = vmatmul.bf16.gmra.mxu0 %v406
  %v835 = vpop.f32.mrf.mxu0
  %v836 = vadd.f32 %v793, %v835
  %v837 = vpop.f32.mrf.mxu0
  %v838 = vadd.f32 %v795, %v837
  %839 = vdwg.mxu0
  %v840 = vpack.c.bf16 %v833, %v831
  %v841 = vpack.c.bf16 %v838, %v836
  %vm842 = vcmask 261120
  %v844 = vsel %vm842, %v99, 0
  %846 = vmatpush.bf16.msra.mxu0 0
  %847 = vmatpush.bf16.msra.mxu0 0
  %848 = vmatpush.bf16.msra.mxu0 0
  %849 = vmatpush.bf16.msra.mxu0 0
  %850 = vmatpush.bf16.msra.mxu0 0
  %851 = vmatpush.bf16.msra.mxu0 0
  %852 = vmatpush.bf16.msra.mxu0 %v841
  %853 = vmatpush.bf16.msra.mxu0 %v840
  %854 = vmatmul.bf16.gmra.mxu0 %v844
  %v855 = vpop.f32.mrf.mxu0
  %v856 = vadd.f32 0.0, %v855
  %v857 = vpop.f32.mrf.mxu0
  %v858 = vadd.f32 0.0, %v857
  %859 = vdwg.mxu0
  %v860 = vadd.f32 %v750, %v856
  %v861 = vadd.f32 %v752, %v858
  %v862 = vperm.slane %v374, 0
  %v863 = vadd.f32 %v860, %v862
  %v864 = vadd.f32 %v861, %v862
  %v865 = vmax.f32 %v863, 0.0
  %v866 = vmax.f32 %v864, 0.0
  %v867 = vpack.c.bf16 %v866, %v865
  %v868 = vperm.slane %v375, 0
  %v877 = vunpack.c.l.b16 %v348
  %v878 = vunpack.c.l.b16 %v349
  %v879 = vunpack.c.l.b16 %v350
  %v880 = vunpack.c.l.b16 %v351
  %v881 = vunpack.c.l.b16 %v352
  %v882 = vunpack.c.l.b16 %v353
  %v883 = vunpack.c.l.b16 %v354
  %v884 = vunpack.c.l.b16 %v355
  %v885 = vpack.c.b16 %v878, %v877
  %v886 = vpack.c.b16 %v880, %v879
  %v887 = vpack.c.b16 %v882, %v881
  %v888 = vpack.c.b16 %v884, %v883
  %v894 = vsel %vm178, %v867, 0
  %896 = vmatpush.bf16.msra.mxu0 0
  %897 = vmatpush.bf16.msra.mxu0 0
  %898 = vmatpush.bf16.msra.mxu0 0
  %899 = vmatpush.bf16.msra.mxu0 0
  %900 = vmatpush.bf16.msra.mxu0 %v888
  %901 = vmatpush.bf16.msra.mxu0 %v887
  %902 = vmatpush.bf16.msra.mxu0 %v886
  %903 = vmatpush.bf16.msra.mxu0 %v885
  %904 = vmatmul.bf16.gmra.mxu0 %v894
  %v905 = vpop.f32.mrf.mxu0
  %v906 = vadd.f32 %v868, %v905
  %v907 = vpop.f32.mrf.mxu0
  %v908 = vadd.f32 %v868, %v907
  %909 = vdwg.mxu0
  %v910 = vmax.f32 %v906, 0.0
  %v911 = vmax.f32 %v908, 0.0
  %v912 = vld [vmem:[%s5 + $0x1b0] sm:$0xf]
  %v913 = vld [vmem:[%s5 + $0x1b4] sm:$0xf]
  %v914 = vld [vmem:[%s5 + $0x1b8] sm:$0xf]
  %v915 = vld [vmem:[%s5 + $0x1bc] sm:$0xf]
  %v916 = vld [vmem:[%s5 + $0x1c0] sm:$0xf]
  %v917 = vld [vmem:[%s5 + $0x1c4] sm:$0xf]
  %v918 = vld [vmem:[%s5 + $0x1c8] sm:$0xf]
  %v919 = vld [vmem:[%s5 + $0x1cc] sm:$0xf]
  %v920 = vld [vmem:[%s5 + $0x1d0] sm:$0xf]
  %v921 = vld [vmem:[%s5 + $0x1d4] sm:$0xf]
  %v922 = vld [vmem:[%s5 + $0x1d8] sm:$0xf]
  %v923 = vld [vmem:[%s5 + $0x1dc] sm:$0xf]
  %v924 = vld [vmem:[%s5 + $0x1e0] sm:$0xf]
  %v925 = vld [vmem:[%s5 + $0x1e4] sm:$0xf]
  %v926 = vld [vmem:[%s5 + $0x1e8] sm:$0xf]
  %v927 = vld [vmem:[%s5 + $0x1ec] sm:$0xf]
  %v928 = vld [vmem:[%s5 + $0x1f0] sm:$0xf]
  %v929 = vld [vmem:[%s5 + $0x1f4] sm:$0xf]
  %v930 = vld [vmem:[%s5 + $0x1f8] sm:$0xf]
  %v931 = vld [vmem:[%s5 + $0x1fc] sm:$0xf]
  %v932 = vld [vmem:[%s5 + $0x200] sm:$0xf]
  %v933 = vld [vmem:[%s5 + $0x204] sm:$0xf]
  %v934 = vld [vmem:[%s5 + $0x208] sm:$0xf]
  %v935 = vld [vmem:[%s5 + $0x20c] sm:$0xf]
  %v936 = vld [vmem:[%s5 + $0x210] sm:$0xf]
  %v937 = vld [vmem:[%s5 + $0x214] sm:$0xf]
  %v938 = vld [vmem:[%s5 + $0x218] sm:$0xf]
  %v939 = vld [vmem:[%s5 + $0x21c] sm:$0xf]
  %v940 = vld [vmem:[%s5 + $0x220] sm:$0xf]
  %v941 = vld [vmem:[%s5 + $0x224] sm:$0xf]
  %v942 = vld [vmem:[%s5 + $0x228] sm:$0xf]
  %v943 = vld [vmem:[%s5 + $0x22c] sm:$0xf]
  %v944 = vld [vmem:[%s5 + $0x230] sm:$0xf]
  %v945 = vld [vmem:[%s5 + $0x234] sm:$0xf]
  %v946 = vld [vmem:[%s5 + $0x238] sm:$0xf]
  %v947 = vld [vmem:[%s5 + $0x23c] sm:$0xf]
  %v948 = vld [vmem:[%s5 + $0x240] sm:$0xf]
  %v949 = vld [vmem:[%s5 + $0x244] sm:$0xf]
  %v950 = vld [vmem:[%s5 + $0x248] sm:$0xf]
  %v951 = vld [vmem:[%s5 + $0x24c] sm:$0xf]
  %v952 = vld [vmem:[%s7 + $0xa] sm:$0x1]
  %v953 = vld [vmem:[%s7 + $0xb] sm:$0x1]
  %v954 = vpack.c.bf16 %v911, %v910
  %v963 = vunpack.c.l.b16 %v920
  %v964 = vunpack.c.l.b16 %v921
  %v965 = vunpack.c.l.b16 %v922
  %v966 = vunpack.c.l.b16 %v923
  %v967 = vunpack.c.l.b16 %v924
  %v968 = vunpack.c.l.b16 %v925
  %v969 = vunpack.c.l.b16 %v926
  %v970 = vunpack.c.l.b16 %v927
  %v971 = vpack.c.b16 %v964, %v963
  %v972 = vpack.c.b16 %v966, %v965
  %v973 = vpack.c.b16 %v968, %v967
  %v974 = vpack.c.b16 %v970, %v969
  %979 = vmatpush.bf16.msra.mxu0 0
  %980 = vmatpush.bf16.msra.mxu0 0
  %981 = vmatpush.bf16.msra.mxu0 0
  %982 = vmatpush.bf16.msra.mxu0 0
  %983 = vmatpush.bf16.msra.mxu0 %v974
  %984 = vmatpush.bf16.msra.mxu0 %v973
  %985 = vmatpush.bf16.msra.mxu0 %v972
  %986 = vmatpush.bf16.msra.mxu0 %v971
  %987 = vmatmul.bf16.gmra.mxu0 %v496
  %v988 = vpop.f32.mrf.mxu0
  %v989 = vadd.f32 0.0, %v988
  %v990 = vpop.f32.mrf.mxu0
  %v991 = vadd.f32 0.0, %v990
  %992 = vdwg.mxu0
  %v1001 = vunpack.c.l.b16 %v912
  %v1002 = vunpack.c.l.b16 %v913
  %v1003 = vunpack.c.l.b16 %v914
  %v1004 = vunpack.c.l.b16 %v915
  %v1005 = vunpack.c.l.b16 %v916
  %v1006 = vunpack.c.l.b16 %v917
  %v1007 = vunpack.c.l.b16 %v918
  %v1008 = vunpack.c.l.b16 %v919
  %v1009 = vpack.c.b16 %v1002, %v1001
  %v1010 = vpack.c.b16 %v1004, %v1003
  %v1011 = vpack.c.b16 %v1006, %v1005
  %v1012 = vpack.c.b16 %v1008, %v1007
  %v1018 = vsel %vm178, %v954, 0
  %1020 = vmatpush.bf16.msra.mxu0 0
  %1021 = vmatpush.bf16.msra.mxu0 0
  %1022 = vmatpush.bf16.msra.mxu0 0
  %1023 = vmatpush.bf16.msra.mxu0 0
  %1024 = vmatpush.bf16.msra.mxu0 %v1012
  %1025 = vmatpush.bf16.msra.mxu0 %v1011
  %1026 = vmatpush.bf16.msra.mxu0 %v1010
  %1027 = vmatpush.bf16.msra.mxu0 %v1009
  %1028 = vmatmul.bf16.gmra.mxu0 %v1018
  %v1029 = vpop.f32.mrf.mxu0
  %v1030 = vadd.f32 %v989, %v1029
  %v1031 = vpop.f32.mrf.mxu0
  %v1032 = vadd.f32 %v991, %v1031
  %1033 = vdwg.mxu0
  %v1034 = vpack.c.bf16 %v675, %v674
  %v1035 = vpack.c.bf16 %v677, %v676
  %v1044 = vunpack.c.l.b16 %v936
  %v1045 = vunpack.c.l.b16 %v937
  %v1046 = vunpack.c.l.b16 %v938
  %v1047 = vunpack.c.l.b16 %v939
  %v1048 = vunpack.c.l.b16 %v940
  %v1049 = vunpack.c.l.b16 %v941
  %v1050 = vunpack.c.l.b16 %v942
  %v1051 = vunpack.c.l.b16 %v943
  %v1052 = vpack.c.b16 %v1045, %v1044
  %v1053 = vpack.c.b16 %v1047, %v1046
  %v1054 = vpack.c.b16 %v1049, %v1048
  %v1055 = vpack.c.b16 %v1051, %v1050
  %1060 = vmatpush.bf16.msra.mxu0 0
  %1061 = vmatpush.bf16.msra.mxu0 0
  %1062 = vmatpush.bf16.msra.mxu0 0
  %1063 = vmatpush.bf16.msra.mxu0 0
  %1064 = vmatpush.bf16.msra.mxu0 %v1055
  %1065 = vmatpush.bf16.msra.mxu0 %v1054
  %1066 = vmatpush.bf16.msra.mxu0 %v1053
  %1067 = vmatpush.bf16.msra.mxu0 %v1052
  %1068 = vmatmul.bf16.gmra.mxu0 %v403
  %v1069 = vpop.f32.mrf.mxu0
  %v1070 = vadd.f32 0.0, %v1069
  %v1071 = vpop.f32.mrf.mxu0
  %v1072 = vadd.f32 0.0, %v1071
  %1073 = vmatmul.bf16.gmra.mxu0 %v406
  %v1074 = vpop.f32.mrf.mxu0
  %v1075 = vadd.f32 0.0, %v1074
  %v1076 = vpop.f32.mrf.mxu0
  %v1077 = vadd.f32 0.0, %v1076
  %1078 = vdwg.mxu0
  %v1087 = vunpack.c.l.b16 %v928
  %v1088 = vunpack.c.l.b16 %v929
  %v1089 = vunpack.c.l.b16 %v930
  %v1090 = vunpack.c.l.b16 %v931
  %v1091 = vunpack.c.l.b16 %v932
  %v1092 = vunpack.c.l.b16 %v933
  %v1093 = vunpack.c.l.b16 %v934
  %v1094 = vunpack.c.l.b16 %v935
  %v1095 = vpack.c.b16 %v1088, %v1087
  %v1096 = vpack.c.b16 %v1090, %v1089
  %v1097 = vpack.c.b16 %v1092, %v1091
  %v1098 = vpack.c.b16 %v1094, %v1093
  %v1104 = vsel %vm178, %v1034, 0
  %v1107 = vsel %vm178, %v1035, 0
  %1109 = vmatpush.bf16.msra.mxu0 0
  %1110 = vmatpush.bf16.msra.mxu0 0
  %1111 = vmatpush.bf16.msra.mxu0 0
  %1112 = vmatpush.bf16.msra.mxu0 0
  %1113 = vmatpush.bf16.msra.mxu0 %v1098
  %1114 = vmatpush.bf16.msra.mxu0 %v1097
  %1115 = vmatpush.bf16.msra.mxu0 %v1096
  %1116 = vmatpush.bf16.msra.mxu0 %v1095
  %1117 = vmatmul.bf16.gmra.mxu0 %v1104
  %v1118 = vpop.f32.mrf.mxu0
  %v1119 = vadd.f32 %v1070, %v1118
  %v1120 = vpop.f32.mrf.mxu0
  %v1121 = vadd.f32 %v1072, %v1120
  %1122 = vmatmul.bf16.gmra.mxu0 %v1107
  %v1123 = vpop.f32.mrf.mxu0
  %v1124 = vadd.f32 %v1075, %v1123
  %v1125 = vpop.f32.mrf.mxu0
  %v1126 = vadd.f32 %v1077, %v1125
  %1127 = vdwg.mxu0
  %v1128 = vpack.c.bf16 %v1121, %v1119
  %v1129 = vpack.c.bf16 %v1126, %v1124
  %1130 = vmatpush.bf16.msra.mxu0 0
  %1131 = vmatpush.bf16.msra.mxu0 0
  %1132 = vmatpush.bf16.msra.mxu0 0
  %1133 = vmatpush.bf16.msra.mxu0 0
  %1134 = vmatpush.bf16.msra.mxu0 0
  %1135 = vmatpush.bf16.msra.mxu0 0
  %1136 = vmatpush.bf16.msra.mxu0 %v1129
  %1137 = vmatpush.bf16.msra.mxu0 %v1128
  %1138 = vmatmul.bf16.gmra.mxu0 %v844
  %v1139 = vpop.f32.mrf.mxu0
  %v1140 = vadd.f32 0.0, %v1139
  %v1141 = vpop.f32.mrf.mxu0
  %v1142 = vadd.f32 0.0, %v1141
  %1143 = vdwg.mxu0
  %v1144 = vadd.f32 %v1030, %v1140
  %v1145 = vadd.f32 %v1032, %v1142
  %v1146 = vperm.slane %v952, 0
  %v1147 = vadd.f32 %v1144, %v1146
  %v1148 = vadd.f32 %v1145, %v1146
  %v1149 = vmax.f32 %v1147, 0.0
  %v1150 = vmax.f32 %v1148, 0.0
  %v1151 = vpack.c.bf16 %v1150, %v1149
  %v1152 = vperm.slane %v953, 0
  %v1161 = vunpack.c.l.b16 %v944
  %v1162 = vunpack.c.l.b16 %v945
  %v1163 = vunpack.c.l.b16 %v946
  %v1164 = vunpack.c.l.b16 %v947
  %v1165 = vunpack.c.l.b16 %v948
  %v1166 = vunpack.c.l.b16 %v949
  %v1167 = vunpack.c.l.b16 %v950
  %v1168 = vunpack.c.l.b16 %v951
  %v1169 = vpack.c.b16 %v1162, %v1161
  %v1170 = vpack.c.b16 %v1164, %v1163
  %v1171 = vpack.c.b16 %v1166, %v1165
  %v1172 = vpack.c.b16 %v1168, %v1167
  %v1178 = vsel %vm178, %v1151, 0
  %1180 = vmatpush.bf16.msra.mxu0 0
  %1181 = vmatpush.bf16.msra.mxu0 0
  %1182 = vmatpush.bf16.msra.mxu0 0
  %1183 = vmatpush.bf16.msra.mxu0 0
  %1184 = vmatpush.bf16.msra.mxu0 %v1172
  %1185 = vmatpush.bf16.msra.mxu0 %v1171
  %1186 = vmatpush.bf16.msra.mxu0 %v1170
  %1187 = vmatpush.bf16.msra.mxu0 %v1169
  %1188 = vmatmul.bf16.gmra.mxu0 %v1178
  %v1189 = vpop.f32.mrf.mxu0
  %v1190 = vadd.f32 %v1152, %v1189
  %v1191 = vpop.f32.mrf.mxu0
  %v1192 = vadd.f32 %v1152, %v1191
  %1193 = vdwg.mxu0
  %v1194 = vmax.f32 %v1190, 0.0
  %v1195 = vmax.f32 %v1192, 0.0
  %v1196 = vld [vmem:[%s5 + $0x250] sm:$0xf]
  %v1197 = vld [vmem:[%s5 + $0x254] sm:$0xf]
  %v1198 = vld [vmem:[%s5 + $0x258] sm:$0xf]
  %v1199 = vld [vmem:[%s5 + $0x25c] sm:$0xf]
  %v1200 = vld [vmem:[%s5 + $0x260] sm:$0xf]
  %v1201 = vld [vmem:[%s5 + $0x264] sm:$0xf]
  %v1202 = vld [vmem:[%s5 + $0x268] sm:$0xf]
  %v1203 = vld [vmem:[%s5 + $0x26c] sm:$0xf]
  %v1204 = vld [vmem:[%s7 + $0xc] sm:$0x1]
  %v1205 = vld [vmem:[%s6 + $0x80] sm:$0xf]
  %v1206 = vld [vmem:[%s6 + $0x84] sm:$0xf]
  %v1207 = vld [vmem:[%s6 + $0x88] sm:$0xf]
  %v1208 = vld [vmem:[%s6 + $0x8c] sm:$0xf]
  %v1209 = vld [vmem:[%s6 + $0x90] sm:$0xf]
  %v1210 = vld [vmem:[%s6 + $0x94] sm:$0xf]
  %v1211 = vld [vmem:[%s6 + $0x98] sm:$0xf]
  %v1212 = vld [vmem:[%s6 + $0x9c] sm:$0xf]
  %v1213 = vld [vmem:[%s7 + $0xd] sm:$0x1]
  %v1214 = vpack.c.bf16 %v1195, %v1194
  %v1215 = vperm.slane %v1204, 0
  %v1224 = vunpack.c.l.b16 %v1196
  %v1225 = vunpack.c.l.b16 %v1197
  %v1226 = vunpack.c.l.b16 %v1198
  %v1227 = vunpack.c.l.b16 %v1199
  %v1228 = vunpack.c.l.b16 %v1200
  %v1229 = vunpack.c.l.b16 %v1201
  %v1230 = vunpack.c.l.b16 %v1202
  %v1231 = vunpack.c.l.b16 %v1203
  %v1232 = vpack.c.b16 %v1225, %v1224
  %v1233 = vpack.c.b16 %v1227, %v1226
  %v1234 = vpack.c.b16 %v1229, %v1228
  %v1235 = vpack.c.b16 %v1231, %v1230
  %v1241 = vsel %vm178, %v1214, 0
  %1243 = vmatpush.bf16.msra.mxu0 0
  %1244 = vmatpush.bf16.msra.mxu0 0
  %1245 = vmatpush.bf16.msra.mxu0 0
  %1246 = vmatpush.bf16.msra.mxu0 0
  %1247 = vmatpush.bf16.msra.mxu0 %v1235
  %1248 = vmatpush.bf16.msra.mxu0 %v1234
  %1249 = vmatpush.bf16.msra.mxu0 %v1233
  %1250 = vmatpush.bf16.msra.mxu0 %v1232
  %1251 = vmatmul.bf16.gmra.mxu0 %v1241
  %v1252 = vpop.f32.mrf.mxu0
  %v1253 = vadd.f32 %v1215, %v1252
  %v1254 = vpop.f32.mrf.mxu0
  %v1255 = vadd.f32 %v1215, %v1254
  %1256 = vdwg.mxu0
  %v1257 = vmax.f32 %v1253, 0.0
  %v1258 = vmax.f32 %v1255, 0.0
  %v1259 = vpack.c.bf16 %v1258, %v1257
  %v1260 = vperm.slane %v1213, 0
  %v1269 = vunpack.c.l.b16 %v1205
  %v1270 = vunpack.c.l.b16 %v1206
  %v1271 = vunpack.c.l.b16 %v1207
  %v1272 = vunpack.c.l.b16 %v1208
  %v1273 = vunpack.c.l.b16 %v1209
  %v1274 = vunpack.c.l.b16 %v1210
  %v1275 = vunpack.c.l.b16 %v1211
  %v1276 = vunpack.c.l.b16 %v1212
  %v1277 = vpack.c.b16 %v1270, %v1269
  %v1278 = vpack.c.b16 %v1272, %v1271
  %v1279 = vpack.c.b16 %v1274, %v1273
  %v1280 = vpack.c.b16 %v1276, %v1275
  %v1286 = vsel %vm178, %v1259, 0
  %1288 = vmatpush.bf16.msra.mxu0 0
  %1289 = vmatpush.bf16.msra.mxu0 0
  %1290 = vmatpush.bf16.msra.mxu0 0
  %1291 = vmatpush.bf16.msra.mxu0 0
  %1292 = vmatpush.bf16.msra.mxu0 %v1280
  %1293 = vmatpush.bf16.msra.mxu0 %v1279
  %1294 = vmatpush.bf16.msra.mxu0 %v1278
  %1295 = vmatpush.bf16.msra.mxu0 %v1277
  %1296 = vmatmul.bf16.gmra.mxu0 %v1286
  %v1297 = vpop.f32.mrf.mxu0
  %v1298 = vadd.f32 %v1260, %v1297
  %v1299 = vpop.f32.mrf.mxu0
  %v1300 = vadd.f32 %v1260, %v1299
  %1301 = vdwg.mxu0
  %1302 = vst [vmem:[%s8] sm:$0xff] %v1298
  %1303 = vst [vmem:[%s8 + $0x8] sm:$0xff] %v1300
  // Predicated region
  $region34: #{paper_gnn_forward.1} parent=0 // pred_check
    _
  $region35: #{paper_gnn_forward.1} parent=0 // pred_check_branch
    %1305 = sbr.rel (0) target = $region37
  $region36: #{paper_gnn_forward.1} parent=0 // pred_region
    _
  $region37: #{paper_gnn_forward.1} parent=0 // pred_fallthru
    _
  // Predicated region
  $region38: #{paper_gnn_forward.1} parent=0 // pred_check
    _
  $region39: #{paper_gnn_forward.1} parent=0 // pred_check_branch
    %1307 = sbr.rel (0) target = $region41
  $region40: #{paper_gnn_forward.1} parent=0 // pred_region
    _
  $region41: #{paper_gnn_forward.1} parent=0 // pred_fallthru
    _

</llo_original>
